<compile_context>
chip_gen: v7x
topology: tpu7x:2x2x1
jax: 0.10.0
libtpu: 0.0.40
codegen_flags: <defaults>
</compile_context>

<pallas_src>
import jax
import jax.numpy as jnp
from jax import lax
from jax.experimental import pallas as pl
from jax.experimental.pallas import tpu as pltpu

_inner_mlp_mult = 2
_BN_EPS = 1e-5
_LANE = 128


def _round_up(x, m):
    return ((x + m - 1) // m) * m


def _bn_relu(x, gamma, beta):
    """Training-mode BatchNorm1d (biased variance over rows) + ReLU, in f32."""
    mu = jnp.mean(x, axis=0, keepdims=True)
    var = jnp.mean((x - mu) ** 2, axis=0, keepdims=True)
    y = (x - mu) * lax.rsqrt(var + _BN_EPS) * gamma + beta
    return jnp.maximum(y, 0.0)


def _mlp_block(x_a_bf, x_b_bf, w1a, w1b, b1, g1, bt1, w2, b2, g2, bt2):
    """cat([x_a, x_b], -1) -> Linear -> BN -> ReLU -> Linear -> BN -> ReLU.

    The concat is folded into the pre-split first-layer weights. Matmul operands are
    bf16, accumulation is f32 (preferred_element_type), BN/ReLU run in f32.
    """
    h = (jnp.dot(x_a_bf, w1a, preferred_element_type=jnp.float32)
         + jnp.dot(x_b_bf, w1b, preferred_element_type=jnp.float32)
         + b1)
    h = _bn_relu(h, g1, bt1)
    o = jnp.dot(h.astype(jnp.bfloat16), w2, preferred_element_type=jnp.float32) + b2
    return _bn_relu(o, g2, bt2)


def _edge_node_kernel(
    node_ref, edge_ref, inc_ref,
    ew1a_ref, ew1b_ref, eb1_ref, eg1_ref, ebt1_ref, ew2_ref, eb2_ref, eg2_ref, ebt2_ref,
    nw1a_ref, nw1b_ref, nb1_ref, ng1_ref, nbt1_ref, nw2_ref, nb2_ref, ng2_ref, nbt2_ref,
    node_out_ref, edge_out_ref,
):
    node_bf = node_ref[...]      # (N, Dp) bf16
    edge_bf = edge_ref[...]      # (E, Dp) bf16
    inc_bf = inc_ref[...]        # (E, N)  bf16  (single copy; no transposed duplicate)

    # --- node -> edge gather (each edge sums its two endpoints): (E,N) @ (N,Dp) on the MXU
    node2edge = jnp.dot(inc_bf, node_bf, preferred_element_type=jnp.float32)   # (E, Dp) f32

    # --- edge MLP on cat([edge_rep, node2edge], -1)
    edge_out = _mlp_block(
        edge_bf, node2edge.astype(jnp.bfloat16),
        ew1a_ref[...], ew1b_ref[...], eb1_ref[...], eg1_ref[...], ebt1_ref[...],
        ew2_ref[...], eb2_ref[...], eg2_ref[...], ebt2_ref[...],
    )                                                                           # (E, Dp) f32
    edge_out_ref[...] = edge_out.astype(edge_out_ref.dtype)

    # --- edge -> node gather: contract over E directly from the (E, N) incidence
    #     (A^T @ edge_out without materializing A^T).
    edge2node = lax.dot_general(
        inc_bf, edge_out.astype(jnp.bfloat16),
        dimension_numbers=(((0,), (0,)), ((), ())),
        preferred_element_type=jnp.float32,
    )                                                                           # (N, Dp) f32

    # --- node MLP on cat([node_rep, edge2node], -1)
    node_out = _mlp_block(
        node_bf, edge2node.astype(jnp.bfloat16),
        nw1a_ref[...], nw1b_ref[...], nb1_ref[...], ng1_ref[...], nbt1_ref[...],
        nw2_ref[...], nb2_ref[...], ng2_ref[...], nbt2_ref[...],
    )                                                                           # (N, Dp) f32
    node_out_ref[...] = node_out.astype(node_out_ref.dtype)


def _pad2(x, rows, cols):
    return jnp.pad(x, ((0, rows - x.shape[0]), (0, cols - x.shape[1])))


def _prep_mlp(params, prefix, D, Dp, Hp):
    """Pre-split + pad one MLP's parameters at trace time (no in-kernel slicing)."""
    w1 = params[prefix + "w1"]
    return (
        _pad2(w1[:D], Dp, Hp).astype(jnp.bfloat16),      # first-layer weight, x_a half
        _pad2(w1[D:], Dp, Hp).astype(jnp.bfloat16),      # first-layer weight, x_b half
        _pad2(params[prefix + "b1"], 1, Hp),
        _pad2(params[prefix + "g1"], 1, Hp),
        _pad2(params[prefix + "bt1"], 1, Hp),
        _pad2(params[prefix + "w2"], Hp, Dp).astype(jnp.bfloat16),
        _pad2(params[prefix + "b2"], 1, Dp),
        _pad2(params[prefix + "g2"], 1, Dp),
        _pad2(params[prefix + "bt2"], 1, Dp),
    )


def edge_node_forward(node_rep, edge_rep, incidence, params):
    """Pallas wrapper. node_rep (N,D), edge_rep (E,D), incidence A (E,N)."""
    N, D = node_rep.shape
    E = edge_rep.shape[0]
    H = params["ew2"].shape[0]
    Dp = _round_up(D, _LANE)     # lane-dense feature dim (32 -> 128)
    Hp = _round_up(H, _LANE)     # lane-dense hidden dim  (64 -> 128)

    # bf16 matmul operands (halves DMA bytes, 2x MXU throughput on v6e/v7x).
    node_bf = _pad2(node_rep, N, Dp).astype(jnp.bfloat16)
    edge_bf = _pad2(edge_rep, E, Dp).astype(jnp.bfloat16)
    inc_bf = incidence.astype(jnp.bfloat16)

    e_params = _prep_mlp(params, "e", D, Dp, Hp)
    n_params = _prep_mlp(params, "n", D, Dp, Hp)
    inputs = (node_bf, edge_bf, inc_bf) + e_params + n_params

    # Advisory cost estimate for XLA's scheduler around the custom call.
    flops = (
        2 * 2 * E * N * Dp                         # both incidence gathers
        + 2 * E * (2 * Dp * Hp + Hp * Dp)          # edge MLP matmuls
        + 2 * N * (2 * Dp * Hp + Hp * Dp)          # node MLP matmuls
    )
    transcendentals = 2 * (Hp + Dp)                # rsqrt per BN feature column
    bytes_accessed = (
        sum(int(a.size) * a.dtype.itemsize for a in inputs)
        + (N + E) * Dp * 4
    )

    vmem_spec = pl.BlockSpec(memory_space=pltpu.MemorySpace.VMEM)
    node_out_p, edge_out_p = pl.pallas_call(
        _edge_node_kernel,
        out_shape=(
            jax.ShapeDtypeStruct((N, Dp), jnp.float32),
            jax.ShapeDtypeStruct((E, Dp), jnp.float32),
        ),
        in_specs=[vmem_spec] * len(inputs),
        out_specs=(vmem_spec, vmem_spec),
        cost_estimate=pl.CostEstimate(
            flops=flops,
            transcendentals=transcendentals,
            bytes_accessed=bytes_accessed,
        ),
    )(*inputs)

    # Strip the lane padding outside the kernel (cheap XLA slice).
    return node_out_p[:, :D], edge_out_p[:, :D]


def _make_mlp_params(key, in_dim, hid_dim, out_dim):
    k1, k2, k3, k4 = jax.random.split(key, 4)
    scale1 = 1.0 / jnp.sqrt(in_dim)
    scale2 = 1.0 / jnp.sqrt(hid_dim)
    return {
        "w1": jax.random.uniform(k1, (in_dim, hid_dim), jnp.float32, -scale1, scale1),
        "b1": jax.random.uniform(k2, (1, hid_dim), jnp.float32, -scale1, scale1),
        "g1": jnp.ones((1, hid_dim), jnp.float32),
        "bt1": jnp.zeros((1, hid_dim), jnp.float32),
        "w2": jax.random.uniform(k3, (hid_dim, out_dim), jnp.float32, -scale2, scale2),
        "b2": jax.random.uniform(k4, (1, out_dim), jnp.float32, -scale2, scale2),
        "g2": jnp.ones((1, out_dim), jnp.float32),
        "bt2": jnp.zeros((1, out_dim), jnp.float32),
    }


def _reference(node_rep, edge_rep, inc, params):
    """Pure-JAX reference mirroring the kernel's bf16-operand / f32-accumulate scheme."""
    bf, f32 = jnp.bfloat16, jnp.float32
    D = node_rep.shape[1]

    def bn_relu(x, g, b):
        mu = x.mean(0, keepdims=True)
        var = ((x - mu) ** 2).mean(0, keepdims=True)
        return jnp.maximum((x - mu) * lax.rsqrt(var + _BN_EPS) * g + b, 0.0)

    def mlp(xa, xb, w1, b1, g1, bt1, w2, b2, g2, bt2):
        h = (jnp.dot(xa.astype(bf), w1[:D].astype(bf), preferred_element_type=f32)
             + jnp.dot(xb.astype(bf), w1[D:].astype(bf), preferred_element_type=f32)
             + b1)
        h = bn_relu(h, g1, bt1)
        o = jnp.dot(h.astype(bf), w2.astype(bf), preferred_element_type=f32) + b2
        return bn_relu(o, g2, bt2)

    inc_bf = inc.astype(bf)
    node2edge = jnp.dot(inc_bf, node_rep.astype(bf), preferred_element_type=f32)
    edge_out = mlp(edge_rep, node2edge,
                   params["ew1"], params["eb1"], params["eg1"], params["ebt1"],
                   params["ew2"], params["eb2"], params["eg2"], params["ebt2"])
    edge2node = lax.dot_general(inc_bf, edge_out.astype(bf),
                                dimension_numbers=(((0,), (0,)), ((), ())),
                                preferred_element_type=f32)
    node_out = mlp(node_rep, edge2node,
                   params["nw1"], params["nb1"], params["ng1"], params["nbt1"],
                   params["nw2"], params["nb2"], params["ng2"], params["nbt2"])
    return node_out, edge_out


if __name__ == "__main__":
    rep_dim = 32
    hid_dim = rep_dim * _inner_mlp_mult   # 64
    N = 16                                 # nodes
    # Deterministic graph: ring + chord edges.
    edges = [(i, (i + 1) % N) for i in range(N)] + [(i, (i + 3) % N) for i in range(N)]
    E = len(edges)                         # 32

    key = jax.random.PRNGKey(0)
    k_node, k_edge, k_emlp, k_nmlp = jax.random.split(key, 4)
    node_rep = jax.random.normal(k_node, (N, rep_dim), jnp.float32)
    edge_rep = jax.random.normal(k_edge, (E, rep_dim), jnp.float32)

    # Incidence matrix A (E, N): A[e, n] = 1 if node n is an endpoint of edge e.
    inc = jnp.zeros((E, N), jnp.float32)
    for e, (u, v) in enumerate(edges):
        inc = inc.at[e, u].set(1.0).at[e, v].set(1.0)

    emlp = _make_mlp_params(k_emlp, 2 * rep_dim, hid_dim, rep_dim)
    nmlp = _make_mlp_params(k_nmlp, 2 * rep_dim, hid_dim, rep_dim)
    params = {
        "ew1": emlp["w1"], "eb1": emlp["b1"], "eg1": emlp["g1"], "ebt1": emlp["bt1"],
        "ew2": emlp["w2"], "eb2": emlp["b2"], "eg2": emlp["g2"], "ebt2": emlp["bt2"],
        "nw1": nmlp["w1"], "nb1": nmlp["b1"], "ng1": nmlp["g1"], "nbt1": nmlp["bt1"],
        "nw2": nmlp["w2"], "nb2": nmlp["b2"], "ng2": nmlp["g2"], "nbt2": nmlp["bt2"],
    }

    node_out, edge_out = edge_node_forward(node_rep, edge_rep, inc, params)
    jax.block_until_ready((node_out, edge_out))

    node_ref, edge_ref = _reference(node_rep, edge_rep, inc, params)
    # bf16 matmul operands + MXU accumulation-order differences => mixed-precision tolerance.
    assert jnp.allclose(node_out, node_ref, atol=2e-2, rtol=2e-2), "node_out mismatch"
    assert jnp.allclose(edge_out, edge_ref, atol=2e-2, rtol=2e-2), "edge_out mismatch"

    print("KERNEL_OK")
</pallas_src>

<mosaic_0001>
module attributes {stable_mosaic.version = 11 : i64} {
  func.func @_edge_node_kernel(%arg0: memref<16x128xbf16, #tpu.memory_space<vmem>>, %arg1: memref<32x128xbf16, #tpu.memory_space<vmem>>, %arg2: memref<32x16xbf16, #tpu.memory_space<vmem>>, %arg3: memref<128x128xbf16, #tpu.memory_space<vmem>>, %arg4: memref<128x128xbf16, #tpu.memory_space<vmem>>, %arg5: memref<1x128xf32, #tpu.memory_space<vmem>>, %arg6: memref<1x128xf32, #tpu.memory_space<vmem>>, %arg7: memref<1x128xf32, #tpu.memory_space<vmem>>, %arg8: memref<128x128xbf16, #tpu.memory_space<vmem>>, %arg9: memref<1x128xf32, #tpu.memory_space<vmem>>, %arg10: memref<1x128xf32, #tpu.memory_space<vmem>>, %arg11: memref<1x128xf32, #tpu.memory_space<vmem>>, %arg12: memref<128x128xbf16, #tpu.memory_space<vmem>>, %arg13: memref<128x128xbf16, #tpu.memory_space<vmem>>, %arg14: memref<1x128xf32, #tpu.memory_space<vmem>>, %arg15: memref<1x128xf32, #tpu.memory_space<vmem>>, %arg16: memref<1x128xf32, #tpu.memory_space<vmem>>, %arg17: memref<128x128xbf16, #tpu.memory_space<vmem>>, %arg18: memref<1x128xf32, #tpu.memory_space<vmem>>, %arg19: memref<1x128xf32, #tpu.memory_space<vmem>>, %arg20: memref<1x128xf32, #tpu.memory_space<vmem>>, %arg21: memref<16x128xf32, #tpu.memory_space<vmem>>, %arg22: memref<32x128xf32, #tpu.memory_space<vmem>>) attributes {dimension_semantics = [], scalar_prefetch = 0 : i64, scratch_operands = 0 : i64, tpu.core_type = #tpu.core_type<tc>} {
    %c0 = arith.constant 0 : index
    %c0_0 = arith.constant 0 : index
    %0 = vector.load %arg0[%c0, %c0_0] : memref<16x128xbf16, #tpu.memory_space<vmem>>, vector<16x128xbf16>
    %c0_1 = arith.constant 0 : index
    %c0_2 = arith.constant 0 : index
    %1 = vector.load %arg1[%c0_1, %c0_2] : memref<32x128xbf16, #tpu.memory_space<vmem>>, vector<32x128xbf16>
    %c0_3 = arith.constant 0 : index
    %c0_4 = arith.constant 0 : index
    %2 = vector.load %arg2[%c0_3, %c0_4] : memref<32x16xbf16, #tpu.memory_space<vmem>>, vector<32x16xbf16>
    %cst = arith.constant dense<0.000000e+00> : vector<32x128xf32>
    %3 = tpu.matmul %2, %0, %cst {dimension_numbers = #tpu.dot_dimension_numbers<[1], [0], [0], [1], [0, 0, 1, 1], [], []>} : vector<32x16xbf16>, vector<16x128xbf16>, vector<32x128xf32> -> vector<32x128xf32>
    %4 = arith.truncf %3 : vector<32x128xf32> to vector<32x128xbf16>
    %c0_5 = arith.constant 0 : index
    %c0_6 = arith.constant 0 : index
    %5 = vector.load %arg3[%c0_5, %c0_6] : memref<128x128xbf16, #tpu.memory_space<vmem>>, vector<128x128xbf16>
    %c0_7 = arith.constant 0 : index
    %c0_8 = arith.constant 0 : index
    %6 = vector.load %arg4[%c0_7, %c0_8] : memref<128x128xbf16, #tpu.memory_space<vmem>>, vector<128x128xbf16>
    %c0_9 = arith.constant 0 : index
    %c0_10 = arith.constant 0 : index
    %7 = vector.load %arg5[%c0_9, %c0_10] : memref<1x128xf32, #tpu.memory_space<vmem>>, vector<1x128xf32>
    %c0_11 = arith.constant 0 : index
    %c0_12 = arith.constant 0 : index
    %8 = vector.load %arg6[%c0_11, %c0_12] : memref<1x128xf32, #tpu.memory_space<vmem>>, vector<1x128xf32>
    %c0_13 = arith.constant 0 : index
    %c0_14 = arith.constant 0 : index
    %9 = vector.load %arg7[%c0_13, %c0_14] : memref<1x128xf32, #tpu.memory_space<vmem>>, vector<1x128xf32>
    %c0_15 = arith.constant 0 : index
    %c0_16 = arith.constant 0 : index
    %10 = vector.load %arg8[%c0_15, %c0_16] : memref<128x128xbf16, #tpu.memory_space<vmem>>, vector<128x128xbf16>
    %c0_17 = arith.constant 0 : index
    %c0_18 = arith.constant 0 : index
    %11 = vector.load %arg9[%c0_17, %c0_18] : memref<1x128xf32, #tpu.memory_space<vmem>>, vector<1x128xf32>
    %c0_19 = arith.constant 0 : index
    %c0_20 = arith.constant 0 : index
    %12 = vector.load %arg10[%c0_19, %c0_20] : memref<1x128xf32, #tpu.memory_space<vmem>>, vector<1x128xf32>
    %c0_21 = arith.constant 0 : index
    %c0_22 = arith.constant 0 : index
    %13 = vector.load %arg11[%c0_21, %c0_22] : memref<1x128xf32, #tpu.memory_space<vmem>>, vector<1x128xf32>
    %cst_23 = arith.constant dense<0.000000e+00> : vector<32x128xf32>
    %14 = tpu.matmul %1, %5, %cst_23 {dimension_numbers = #tpu.dot_dimension_numbers<[1], [0], [0], [1], [0, 0, 1, 1], [], []>} : vector<32x128xbf16>, vector<128x128xbf16>, vector<32x128xf32> -> vector<32x128xf32>
    %cst_24 = arith.constant dense<0.000000e+00> : vector<32x128xf32>
    %15 = tpu.matmul %4, %6, %cst_24 {dimension_numbers = #tpu.dot_dimension_numbers<[1], [0], [0], [1], [0, 0, 1, 1], [], []>} : vector<32x128xbf16>, vector<128x128xbf16>, vector<32x128xf32> -> vector<32x128xf32>
    %16 = arith.addf %14, %15 : vector<32x128xf32>
    %17 = vector.broadcast %7 : vector<1x128xf32> to vector<32x128xf32>
    %18 = arith.addf %16, %17 : vector<32x128xf32>
    %cst_25 = arith.constant dense<0.000000e+00> : vector<128xf32>
    %19 = vector.multi_reduction <add>, %18, %cst_25 [0] : vector<32x128xf32> to vector<128xf32>
    %20 = vector.shape_cast %19 : vector<128xf32> to vector<1x128xf32>
    %cst_26 = arith.constant 3.200000e+01 : f32
    %21 = vector.broadcast %cst_26 : f32 to vector<1x128xf32>
    %22 = arith.divf %20, %21 : vector<1x128xf32>
    %23 = vector.broadcast %22 : vector<1x128xf32> to vector<32x128xf32>
    %24 = arith.subf %18, %23 : vector<32x128xf32>
    %25 = arith.mulf %24, %24 : vector<32x128xf32>
    %cst_27 = arith.constant dense<0.000000e+00> : vector<128xf32>
    %26 = vector.multi_reduction <add>, %25, %cst_27 [0] : vector<32x128xf32> to vector<128xf32>
    %27 = vector.shape_cast %26 : vector<128xf32> to vector<1x128xf32>
    %cst_28 = arith.constant 3.200000e+01 : f32
    %28 = vector.broadcast %cst_28 : f32 to vector<1x128xf32>
    %29 = arith.divf %27, %28 : vector<1x128xf32>
    %30 = vector.broadcast %22 : vector<1x128xf32> to vector<32x128xf32>
    %31 = arith.subf %18, %30 : vector<32x128xf32>
    %cst_29 = arith.constant 9.99999974E-6 : f32
    %32 = vector.broadcast %cst_29 : f32 to vector<1x128xf32>
    %33 = arith.addf %29, %32 : vector<1x128xf32>
    %34 = math.rsqrt %33 : vector<1x128xf32>
    %35 = vector.broadcast %34 : vector<1x128xf32> to vector<32x128xf32>
    %36 = arith.mulf %31, %35 : vector<32x128xf32>
    %37 = vector.broadcast %8 : vector<1x128xf32> to vector<32x128xf32>
    %38 = arith.mulf %36, %37 : vector<32x128xf32>
    %39 = vector.broadcast %9 : vector<1x128xf32> to vector<32x128xf32>
    %40 = arith.addf %38, %39 : vector<32x128xf32>
    %cst_30 = arith.constant 0.000000e+00 : f32
    %41 = vector.broadcast %cst_30 : f32 to vector<32x128xf32>
    %42 = arith.maximumf %40, %41 : vector<32x128xf32>
    %43 = arith.truncf %42 : vector<32x128xf32> to vector<32x128xbf16>
    %cst_31 = arith.constant dense<0.000000e+00> : vector<32x128xf32>
    %44 = tpu.matmul %43, %10, %cst_31 {dimension_numbers = #tpu.dot_dimension_numbers<[1], [0], [0], [1], [0, 0, 1, 1], [], []>} : vector<32x128xbf16>, vector<128x128xbf16>, vector<32x128xf32> -> vector<32x128xf32>
    %45 = vector.broadcast %11 : vector<1x128xf32> to vector<32x128xf32>
    %46 = arith.addf %44, %45 : vector<32x128xf32>
    %cst_32 = arith.constant dense<0.000000e+00> : vector<128xf32>
    %47 = vector.multi_reduction <add>, %46, %cst_32 [0] : vector<32x128xf32> to vector<128xf32>
    %48 = vector.shape_cast %47 : vector<128xf32> to vector<1x128xf32>
    %cst_33 = arith.constant 3.200000e+01 : f32
    %49 = vector.broadcast %cst_33 : f32 to vector<1x128xf32>
    %50 = arith.divf %48, %49 : vector<1x128xf32>
    %51 = vector.broadcast %50 : vector<1x128xf32> to vector<32x128xf32>
    %52 = arith.subf %46, %51 : vector<32x128xf32>
    %53 = arith.mulf %52, %52 : vector<32x128xf32>
    %cst_34 = arith.constant dense<0.000000e+00> : vector<128xf32>
    %54 = vector.multi_reduction <add>, %53, %cst_34 [0] : vector<32x128xf32> to vector<128xf32>
    %55 = vector.shape_cast %54 : vector<128xf32> to vector<1x128xf32>
    %cst_35 = arith.constant 3.200000e+01 : f32
    %56 = vector.broadcast %cst_35 : f32 to vector<1x128xf32>
    %57 = arith.divf %55, %56 : vector<1x128xf32>
    %58 = vector.broadcast %50 : vector<1x128xf32> to vector<32x128xf32>
    %59 = arith.subf %46, %58 : vector<32x128xf32>
    %cst_36 = arith.constant 9.99999974E-6 : f32
    %60 = vector.broadcast %cst_36 : f32 to vector<1x128xf32>
    %61 = arith.addf %57, %60 : vector<1x128xf32>
    %62 = math.rsqrt %61 : vector<1x128xf32>
    %63 = vector.broadcast %62 : vector<1x128xf32> to vector<32x128xf32>
    %64 = arith.mulf %59, %63 : vector<32x128xf32>
    %65 = vector.broadcast %12 : vector<1x128xf32> to vector<32x128xf32>
    %66 = arith.mulf %64, %65 : vector<32x128xf32>
    %67 = vector.broadcast %13 : vector<1x128xf32> to vector<32x128xf32>
    %68 = arith.addf %66, %67 : vector<32x128xf32>
    %cst_37 = arith.constant 0.000000e+00 : f32
    %69 = vector.broadcast %cst_37 : f32 to vector<32x128xf32>
    %70 = arith.maximumf %68, %69 : vector<32x128xf32>
    %c0_38 = arith.constant 0 : index
    %c0_39 = arith.constant 0 : index
    %71 = vector.load %arg22[%c0_38, %c0_39] : memref<32x128xf32, #tpu.memory_space<vmem>>, vector<32x128xf32>
    tpu.vector_store %arg22[%c0_38, %c0_39], %70 {strides = array<i32>} : memref<32x128xf32, #tpu.memory_space<vmem>>, vector<32x128xf32>,
    %72 = arith.truncf %70 : vector<32x128xf32> to vector<32x128xbf16>
    %cst_40 = arith.constant dense<0.000000e+00> : vector<16x128xf32>
    %73 = tpu.matmul %2, %72, %cst_40 {dimension_numbers = #tpu.dot_dimension_numbers<[0], [0], [1], [1], [0, 1, 1, 1], [], []>} : vector<32x16xbf16>, vector<32x128xbf16>, vector<16x128xf32> -> vector<16x128xf32>
    %74 = arith.truncf %73 : vector<16x128xf32> to vector<16x128xbf16>
    %c0_41 = arith.constant 0 : index
    %c0_42 = arith.constant 0 : index
    %75 = vector.load %arg12[%c0_41, %c0_42] : memref<128x128xbf16, #tpu.memory_space<vmem>>, vector<128x128xbf16>
    %c0_43 = arith.constant 0 : index
    %c0_44 = arith.constant 0 : index
    %76 = vector.load %arg13[%c0_43, %c0_44] : memref<128x128xbf16, #tpu.memory_space<vmem>>, vector<128x128xbf16>
    %c0_45 = arith.constant 0 : index
    %c0_46 = arith.constant 0 : index
    %77 = vector.load %arg14[%c0_45, %c0_46] : memref<1x128xf32, #tpu.memory_space<vmem>>, vector<1x128xf32>
    %c0_47 = arith.constant 0 : index
    %c0_48 = arith.constant 0 : index
    %78 = vector.load %arg15[%c0_47, %c0_48] : memref<1x128xf32, #tpu.memory_space<vmem>>, vector<1x128xf32>
    %c0_49 = arith.constant 0 : index
    %c0_50 = arith.constant 0 : index
    %79 = vector.load %arg16[%c0_49, %c0_50] : memref<1x128xf32, #tpu.memory_space<vmem>>, vector<1x128xf32>
    %c0_51 = arith.constant 0 : index
    %c0_52 = arith.constant 0 : index
    %80 = vector.load %arg17[%c0_51, %c0_52] : memref<128x128xbf16, #tpu.memory_space<vmem>>, vector<128x128xbf16>
    %c0_53 = arith.constant 0 : index
    %c0_54 = arith.constant 0 : index
    %81 = vector.load %arg18[%c0_53, %c0_54] : memref<1x128xf32, #tpu.memory_space<vmem>>, vector<1x128xf32>
    %c0_55 = arith.constant 0 : index
    %c0_56 = arith.constant 0 : index
    %82 = vector.load %arg19[%c0_55, %c0_56] : memref<1x128xf32, #tpu.memory_space<vmem>>, vector<1x128xf32>
    %c0_57 = arith.constant 0 : index
    %c0_58 = arith.constant 0 : index
    %83 = vector.load %arg20[%c0_57, %c0_58] : memref<1x128xf32, #tpu.memory_space<vmem>>, vector<1x128xf32>
    %cst_59 = arith.constant dense<0.000000e+00> : vector<16x128xf32>
    %84 = tpu.matmul %0, %75, %cst_59 {dimension_numbers = #tpu.dot_dimension_numbers<[1], [0], [0], [1], [0, 0, 1, 1], [], []>} : vector<16x128xbf16>, vector<128x128xbf16>, vector<16x128xf32> -> vector<16x128xf32>
    %cst_60 = arith.constant dense<0.000000e+00> : vector<16x128xf32>
    %85 = tpu.matmul %74, %76, %cst_60 {dimension_numbers = #tpu.dot_dimension_numbers<[1], [0], [0], [1], [0, 0, 1, 1], [], []>} : vector<16x128xbf16>, vector<128x128xbf16>, vector<16x128xf32> -> vector<16x128xf32>
    %86 = arith.addf %84, %85 : vector<16x128xf32>
    %87 = vector.broadcast %77 : vector<1x128xf32> to vector<16x128xf32>
    %88 = arith.addf %86, %87 : vector<16x128xf32>
    %cst_61 = arith.constant dense<0.000000e+00> : vector<128xf32>
    %89 = vector.multi_reduction <add>, %88, %cst_61 [0] : vector<16x128xf32> to vector<128xf32>
    %90 = vector.shape_cast %89 : vector<128xf32> to vector<1x128xf32>
    %cst_62 = arith.constant 1.600000e+01 : f32
    %91 = vector.broadcast %cst_62 : f32 to vector<1x128xf32>
    %92 = arith.divf %90, %91 : vector<1x128xf32>
    %93 = vector.broadcast %92 : vector<1x128xf32> to vector<16x128xf32>
    %94 = arith.subf %88, %93 : vector<16x128xf32>
    %95 = arith.mulf %94, %94 : vector<16x128xf32>
    %cst_63 = arith.constant dense<0.000000e+00> : vector<128xf32>
    %96 = vector.multi_reduction <add>, %95, %cst_63 [0] : vector<16x128xf32> to vector<128xf32>
    %97 = vector.shape_cast %96 : vector<128xf32> to vector<1x128xf32>
    %cst_64 = arith.constant 1.600000e+01 : f32
    %98 = vector.broadcast %cst_64 : f32 to vector<1x128xf32>
    %99 = arith.divf %97, %98 : vector<1x128xf32>
    %100 = vector.broadcast %92 : vector<1x128xf32> to vector<16x128xf32>
    %101 = arith.subf %88, %100 : vector<16x128xf32>
    %cst_65 = arith.constant 9.99999974E-6 : f32
    %102 = vector.broadcast %cst_65 : f32 to vector<1x128xf32>
    %103 = arith.addf %99, %102 : vector<1x128xf32>
    %104 = math.rsqrt %103 : vector<1x128xf32>
    %105 = vector.broadcast %104 : vector<1x128xf32> to vector<16x128xf32>
    %106 = arith.mulf %101, %105 : vector<16x128xf32>
    %107 = vector.broadcast %78 : vector<1x128xf32> to vector<16x128xf32>
    %108 = arith.mulf %106, %107 : vector<16x128xf32>
    %109 = vector.broadcast %79 : vector<1x128xf32> to vector<16x128xf32>
    %110 = arith.addf %108, %109 : vector<16x128xf32>
    %cst_66 = arith.constant 0.000000e+00 : f32
    %111 = vector.broadcast %cst_66 : f32 to vector<16x128xf32>
    %112 = arith.maximumf %110, %111 : vector<16x128xf32>
    %113 = arith.truncf %112 : vector<16x128xf32> to vector<16x128xbf16>
    %cst_67 = arith.constant dense<0.000000e+00> : vector<16x128xf32>
    %114 = tpu.matmul %113, %80, %cst_67 {dimension_numbers = #tpu.dot_dimension_numbers<[1], [0], [0], [1], [0, 0, 1, 1], [], []>} : vector<16x128xbf16>, vector<128x128xbf16>, vector<16x128xf32> -> vector<16x128xf32>
    %115 = vector.broadcast %81 : vector<1x128xf32> to vector<16x128xf32>
    %116 = arith.addf %114, %115 : vector<16x128xf32>
    %cst_68 = arith.constant dense<0.000000e+00> : vector<128xf32>
    %117 = vector.multi_reduction <add>, %116, %cst_68 [0] : vector<16x128xf32> to vector<128xf32>
    %118 = vector.shape_cast %117 : vector<128xf32> to vector<1x128xf32>
    %cst_69 = arith.constant 1.600000e+01 : f32
    %119 = vector.broadcast %cst_69 : f32 to vector<1x128xf32>
    %120 = arith.divf %118, %119 : vector<1x128xf32>
    %121 = vector.broadcast %120 : vector<1x128xf32> to vector<16x128xf32>
    %122 = arith.subf %116, %121 : vector<16x128xf32>
    %123 = arith.mulf %122, %122 : vector<16x128xf32>
    %cst_70 = arith.constant dense<0.000000e+00> : vector<128xf32>
    %124 = vector.multi_reduction <add>, %123, %cst_70 [0] : vector<16x128xf32> to vector<128xf32>
    %125 = vector.shape_cast %124 : vector<128xf32> to vector<1x128xf32>
    %cst_71 = arith.constant 1.600000e+01 : f32
    %126 = vector.broadcast %cst_71 : f32 to vector<1x128xf32>
    %127 = arith.divf %125, %126 : vector<1x128xf32>
    %128 = vector.broadcast %120 : vector<1x128xf32> to vector<16x128xf32>
    %129 = arith.subf %116, %128 : vector<16x128xf32>
    %cst_72 = arith.constant 9.99999974E-6 : f32
    %130 = vector.broadcast %cst_72 : f32 to vector<1x128xf32>
    %131 = arith.addf %127, %130 : vector<1x128xf32>
    %132 = math.rsqrt %131 : vector<1x128xf32>
    %133 = vector.broadcast %132 : vector<1x128xf32> to vector<16x128xf32>
    %134 = arith.mulf %129, %133 : vector<16x128xf32>
    %135 = vector.broadcast %82 : vector<1x128xf32> to vector<16x128xf32>
    %136 = arith.mulf %134, %135 : vector<16x128xf32>
    %137 = vector.broadcast %83 : vector<1x128xf32> to vector<16x128xf32>
    %138 = arith.addf %136, %137 : vector<16x128xf32>
    %cst_73 = arith.constant 0.000000e+00 : f32
    %139 = vector.broadcast %cst_73 : f32 to vector<16x128xf32>
    %140 = arith.maximumf %138, %139 : vector<16x128xf32>
    %c0_74 = arith.constant 0 : index
    %c0_75 = arith.constant 0 : index
    %141 = vector.load %arg21[%c0_74, %c0_75] : memref<16x128xf32, #tpu.memory_space<vmem>>, vector<16x128xf32>
    tpu.vector_store %arg21[%c0_74, %c0_75], %140 {strides = array<i32>} : memref<16x128xf32, #tpu.memory_space<vmem>>, vector<16x128xf32>,
    return
  }
}

</mosaic_0001>

<llo_original>
// kernel: tpu_custom_call.1
$region0: #{tpu_custom_call.1}
  #allocation0 [shape = 'u32[]', space=smem, size = 0x4, offset = 0x4, fixed_abs, tag = 'smem constant byte address 0x4 - core index']
  #allocation1 [shape = 'u32[144,128]{1,0:T(1,128)}', space=vmem, size = 0x12000, scoped, tag = 'internal scratch']
  %s0 = inlined_call_operand.hbm [shape: bf16[16,128], index: 0, kind: input, shape index: {}]
  %s1 = inlined_call_operand.hbm [shape: bf16[32,128], index: 1, kind: input, shape index: {}]
  %s2 = inlined_call_operand.vmem [shape: bf16[32,16], index: 2, kind: input, shape index: {}]
  %s3 = inlined_call_operand.hbm [shape: bf16[128,128], index: 3, kind: input, shape index: {}]
  %s4 = inlined_call_operand.hbm [shape: bf16[128,128], index: 4, kind: input, shape index: {}]
  %s5 = inlined_call_operand.vmem [shape: f32[1,128], index: 5, kind: input, shape index: {}]
  %s6 = inlined_call_operand.vmem [shape: f32[1,128], index: 6, kind: input, shape index: {}]
  %s7 = inlined_call_operand.vmem [shape: f32[1,128], index: 7, kind: input, shape index: {}]
  %s8 = inlined_call_operand.hbm [shape: bf16[128,128], index: 8, kind: input, shape index: {}]
  %s9 = inlined_call_operand.vmem [shape: f32[1,128], index: 9, kind: input, shape index: {}]
  %s10 = inlined_call_operand.vmem [shape: f32[1,128], index: 10, kind: input, shape index: {}]
  %s11 = inlined_call_operand.hbm [shape: f32[1,128], index: 11, kind: input, shape index: {}]
  %s12 = inlined_call_operand.vmem [shape: bf16[128,128], index: 12, kind: input, shape index: {}]
  %s13 = inlined_call_operand.hbm [shape: bf16[128,128], index: 13, kind: input, shape index: {}]
  %s14 = inlined_call_operand.vmem [shape: f32[1,128], index: 14, kind: input, shape index: {}]
  %s15 = inlined_call_operand.vmem [shape: f32[1,128], index: 15, kind: input, shape index: {}]
  %s16 = inlined_call_operand.vmem [shape: f32[1,128], index: 16, kind: input, shape index: {}]
  %s17 = inlined_call_operand.hbm [shape: bf16[128,128], index: 17, kind: input, shape index: {}]
  %s18 = inlined_call_operand.vmem [shape: f32[1,128], index: 18, kind: input, shape index: {}]
  %s19 = inlined_call_operand.vmem [shape: f32[1,128], index: 19, kind: input, shape index: {}]
  %s20 = inlined_call_operand.vmem [shape: f32[1,128], index: 20, kind: input, shape index: {}]
  %s21 = inlined_call_operand.hbm [shape: f32[16,128], index: 21, kind: output, shape index: {0}]
  %s22 = inlined_call_operand.hbm [shape: f32[32,128], index: 22, kind: output, shape index: {1}]
  %23 = xla_tuple %s21, %s22
  %s24 = sld [smem:[#allocation0]]
  $region134: #{tpu_custom_call.1} parent=0
    _
  %s26 = ssub.s32 1, %s24
  %s27 = scalar_select 0, %s26, %s24
  $region1: #{tpu_custom_call.1} parent=0
    #allocation2 [shape = 'u8[4096]{0}', space=vmem, size = 0x1000, scoped, tag = 'input window, operand 0, single buffered']
    #allocation3 [shape = 's32[1]{0}', space=sflag, size = 0x4, scoped, tag = 'scoped memory for tpu_custom_call.1']
    #allocation4 [shape = 's32[1]{0}', space=sflag, size = 0x4, scoped, tag = 'scoped memory for tpu_custom_call.1']
    #allocation5 [shape = 'u8[8192]{0}', space=vmem, size = 0x2000, scoped, tag = 'input window, operand 1, single buffered']
    #allocation6 [shape = 's32[1]{0}', space=sflag, size = 0x4, scoped, tag = 'scoped memory for tpu_custom_call.1']
    #allocation7 [shape = 'u8[32768]{0}', space=vmem, size = 0x8000, scoped, tag = 'input window, operand 3, single buffered']
    #allocation8 [shape = 'u8[32768]{0}', space=vmem, size = 0x8000, scoped, tag = 'input window, operand 4, single buffered']
    #allocation9 [shape = 's32[1]{0}', space=sflag, size = 0x4, scoped, tag = 'scoped memory for tpu_custom_call.1']
    #allocation10 [shape = 'u8[32768]{0}', space=vmem, size = 0x8000, scoped, tag = 'input window, operand 8, single buffered']
    #allocation11 [shape = 'u8[512]{0}', space=vmem, size = 0x400, scoped, tag = 'input window, operand 11, single buffered']
    #allocation12 [shape = 's32[1]{0}', space=sflag, size = 0x4, scoped, tag = 'scoped memory for tpu_custom_call.1']
    #allocation13 [shape = 'u8[32768]{0}', space=vmem, size = 0x8000, scoped, tag = 'input window, operand 13, single buffered']
    #allocation14 [shape = 'u8[32768]{0}', space=vmem, size = 0x8000, scoped, tag = 'input window, operand 17, single buffered']
    #allocation15 [shape = 's32[1]{0}', space=sflag, size = 0x4, scoped, tag = 'scoped memory for tpu_custom_call.1']
    #allocation16 [shape = 'u8[8192]{0}', space=vmem, size = 0x2000, scoped, tag = 'output window, operand 0, single buffered']
    #allocation17 [shape = 'u8[16384]{0}', space=vmem, size = 0x4000, scoped, tag = 'output window, operand 1, single buffered']
    #allocation18 [shape = 's32[1]{0}', space=sflag, size = 0x4, scoped, tag = 'scoped memory for tpu_custom_call.1']
    %28 = vsyncpa [#allocation3], 0
    %29 = vsyncpa [#allocation6], 0
    %30 = vsyncpa [#allocation9], 0
    %31 = vsyncpa [#allocation12], 0
    %32 = vsyncpa [#allocation15], 0
    %33 = vsyncpa [#allocation4], 0
    %34 = vsyncpa [#allocation18], 0
    // Predicated region
    $region2: #{tpu_custom_call.1} parent=1 // pred_check
      _
    $region3: #{tpu_custom_call.1} parent=1 // pred_check_branch
      %36 = sbr.rel (0) target = $region5
    $region4: #{tpu_custom_call.1} parent=1 // pred_region
      %s38 = ssub.s32 128, 128
      %39 = vsyncadd [#allocation3], %s38
      %s40 = sshll.u32 [#allocation2], 4
      %s41 = int_to_ptr.vmem [resolvable:$true] %s40
      %46 = dma.hbm_to_vmem [thread:$0]  %s0, 128, %s41, [#allocation3], 64, 64, 4
    $region5: #{tpu_custom_call.1} parent=1 // pred_fallthru
      _
    // Predicated region
    $region6: #{tpu_custom_call.1} parent=1 // pred_check
      _
    $region7: #{tpu_custom_call.1} parent=1 // pred_check_branch
      %48 = sbr.rel (0) target = $region9
    $region8: #{tpu_custom_call.1} parent=1 // pred_region
      %s50 = ssub.s32 256, 256
      %51 = vsyncadd [#allocation6], %s50
      %s52 = sshll.u32 [#allocation5], 4
      %s53 = int_to_ptr.vmem [resolvable:$true] %s52
      %58 = dma.hbm_to_vmem [thread:$0]  %s1, 256, %s53, [#allocation6], 64, 64, 4
    $region9: #{tpu_custom_call.1} parent=1 // pred_fallthru
      _
    // Predicated region
    $region10: #{tpu_custom_call.1} parent=1 // pred_check
      _
    $region11: #{tpu_custom_call.1} parent=1 // pred_check_branch
      %60 = sbr.rel (0) target = $region13
    $region12: #{tpu_custom_call.1} parent=1 // pred_region
      _
    $region13: #{tpu_custom_call.1} parent=1 // pred_fallthru
      _
    // Predicated region
    $region14: #{tpu_custom_call.1} parent=1 // pred_check
      _
    $region15: #{tpu_custom_call.1} parent=1 // pred_check_branch
      %62 = sbr.rel (0) target = $region17
    $region16: #{tpu_custom_call.1} parent=1 // pred_region
      %s64 = ssub.s32 1024, 1024
      %65 = vsyncadd [#allocation6], %s64
      %s66 = sshll.u32 [#allocation7], 4
      %s67 = int_to_ptr.vmem [resolvable:$true] %s66
      %72 = dma.hbm_to_vmem [thread:$0]  %s3, 1024, %s67, [#allocation6], 64, 64, 4
    $region17: #{tpu_custom_call.1} parent=1 // pred_fallthru
      _
    // Predicated region
    $region18: #{tpu_custom_call.1} parent=1 // pred_check
      _
    $region19: #{tpu_custom_call.1} parent=1 // pred_check_branch
      %74 = sbr.rel (0) target = $region21
    $region20: #{tpu_custom_call.1} parent=1 // pred_region
      %s76 = ssub.s32 1024, 1024
      %77 = vsyncadd [#allocation9], %s76
      %s78 = sshll.u32 [#allocation8], 4
      %s79 = int_to_ptr.vmem [resolvable:$true] %s78
      %84 = dma.hbm_to_vmem [thread:$0]  %s4, 1024, %s79, [#allocation9], 64, 64, 4
    $region21: #{tpu_custom_call.1} parent=1 // pred_fallthru
      _
    // Predicated region
    $region22: #{tpu_custom_call.1} parent=1 // pred_check
      _
    $region23: #{tpu_custom_call.1} parent=1 // pred_check_branch
      %86 = sbr.rel (0) target = $region25
    $region24: #{tpu_custom_call.1} parent=1 // pred_region
      _
    $region25: #{tpu_custom_call.1} parent=1 // pred_fallthru
      _
    // Predicated region
    $region26: #{tpu_custom_call.1} parent=1 // pred_check
      _
    $region27: #{tpu_custom_call.1} parent=1 // pred_check_branch
      %88 = sbr.rel (0) target = $region29
    $region28: #{tpu_custom_call.1} parent=1 // pred_region
      _
    $region29: #{tpu_custom_call.1} parent=1 // pred_fallthru
      _
    // Predicated region
    $region30: #{tpu_custom_call.1} parent=1 // pred_check
      _
    $region31: #{tpu_custom_call.1} parent=1 // pred_check_branch
      %90 = sbr.rel (0) target = $region33
    $region32: #{tpu_custom_call.1} parent=1 // pred_region
      _
    $region33: #{tpu_custom_call.1} parent=1 // pred_fallthru
      _
    // Predicated region
    $region34: #{tpu_custom_call.1} parent=1 // pred_check
      _
    $region35: #{tpu_custom_call.1} parent=1 // pred_check_branch
      %92 = sbr.rel (0) target = $region37
    $region36: #{tpu_custom_call.1} parent=1 // pred_region
      %s94 = ssub.s32 1024, 1024
      %95 = vsyncadd [#allocation9], %s94
      %s96 = sshll.u32 [#allocation10], 4
      %s97 = int_to_ptr.vmem [resolvable:$true] %s96
      %102 = dma.hbm_to_vmem [thread:$0]  %s8, 1024, %s97, [#allocation9], 64, 64, 4
    $region37: #{tpu_custom_call.1} parent=1 // pred_fallthru
      _
    // Predicated region
    $region38: #{tpu_custom_call.1} parent=1 // pred_check
      _
    $region39: #{tpu_custom_call.1} parent=1 // pred_check_branch
      %104 = sbr.rel (0) target = $region41
    $region40: #{tpu_custom_call.1} parent=1 // pred_region
      _
    $region41: #{tpu_custom_call.1} parent=1 // pred_fallthru
      _
    // Predicated region
    $region42: #{tpu_custom_call.1} parent=1 // pred_check
      _
    $region43: #{tpu_custom_call.1} parent=1 // pred_check_branch
      %106 = sbr.rel (0) target = $region45
    $region44: #{tpu_custom_call.1} parent=1 // pred_region
      _
    $region45: #{tpu_custom_call.1} parent=1 // pred_fallthru
      _
    // Predicated region
    $region46: #{tpu_custom_call.1} parent=1 // pred_check
      _
    $region47: #{tpu_custom_call.1} parent=1 // pred_check_branch
      %108 = sbr.rel (0) target = $region49
    $region48: #{tpu_custom_call.1} parent=1 // pred_region
      %s110 = ssub.s32 16, 16
      %111 = vsyncadd [#allocation12], %s110
      %s113 = sshll.u32 [#allocation11], 4
      %s114 = int_to_ptr.vmem [resolvable:$true] %s113
      %116 = dma.hbm_to_vmem [thread:$0]  %s11, 16, %s114, [#allocation12]
    $region49: #{tpu_custom_call.1} parent=1 // pred_fallthru
      _
    // Predicated region
    $region50: #{tpu_custom_call.1} parent=1 // pred_check
      _
    $region51: #{tpu_custom_call.1} parent=1 // pred_check_branch
      %118 = sbr.rel (0) target = $region53
    $region52: #{tpu_custom_call.1} parent=1 // pred_region
      _
    $region53: #{tpu_custom_call.1} parent=1 // pred_fallthru
      _
    // Predicated region
    $region54: #{tpu_custom_call.1} parent=1 // pred_check
      _
    $region55: #{tpu_custom_call.1} parent=1 // pred_check_branch
      %120 = sbr.rel (0) target = $region57
    $region56: #{tpu_custom_call.1} parent=1 // pred_region
      %s122 = ssub.s32 1024, 1024
      %123 = vsyncadd [#allocation12], %s122
      %s124 = sshll.u32 [#allocation13], 4
      %s125 = int_to_ptr.vmem [resolvable:$true] %s124
      %130 = dma.hbm_to_vmem [thread:$0]  %s13, 1024, %s125, [#allocation12], 64, 64, 4
    $region57: #{tpu_custom_call.1} parent=1 // pred_fallthru
      _
    // Predicated region
    $region58: #{tpu_custom_call.1} parent=1 // pred_check
      _
    $region59: #{tpu_custom_call.1} parent=1 // pred_check_branch
      %132 = sbr.rel (0) target = $region61
    $region60: #{tpu_custom_call.1} parent=1 // pred_region
      _
    $region61: #{tpu_custom_call.1} parent=1 // pred_fallthru
      _
    // Predicated region
    $region62: #{tpu_custom_call.1} parent=1 // pred_check
      _
    $region63: #{tpu_custom_call.1} parent=1 // pred_check_branch
      %134 = sbr.rel (0) target = $region65
    $region64: #{tpu_custom_call.1} parent=1 // pred_region
      _
    $region65: #{tpu_custom_call.1} parent=1 // pred_fallthru
      _
    // Predicated region
    $region66: #{tpu_custom_call.1} parent=1 // pred_check
      _
    $region67: #{tpu_custom_call.1} parent=1 // pred_check_branch
      %136 = sbr.rel (0) target = $region69
    $region68: #{tpu_custom_call.1} parent=1 // pred_region
      _
    $region69: #{tpu_custom_call.1} parent=1 // pred_fallthru
      _
    // Predicated region
    $region70: #{tpu_custom_call.1} parent=1 // pred_check
      _
    $region71: #{tpu_custom_call.1} parent=1 // pred_check_branch
      %138 = sbr.rel (0) target = $region73
    $region72: #{tpu_custom_call.1} parent=1 // pred_region
      %s140 = ssub.s32 1024, 1024
      %141 = vsyncadd [#allocation15], %s140
      %s142 = sshll.u32 [#allocation14], 4
      %s143 = int_to_ptr.vmem [resolvable:$true] %s142
      %148 = dma.hbm_to_vmem [thread:$0]  %s17, 1024, %s143, [#allocation15], 64, 64, 4
    $region73: #{tpu_custom_call.1} parent=1 // pred_fallthru
      _
    // Predicated region
    $region74: #{tpu_custom_call.1} parent=1 // pred_check
      _
    $region75: #{tpu_custom_call.1} parent=1 // pred_check_branch
      %150 = sbr.rel (0) target = $region77
    $region76: #{tpu_custom_call.1} parent=1 // pred_region
      _
    $region77: #{tpu_custom_call.1} parent=1 // pred_fallthru
      _
    // Predicated region
    $region78: #{tpu_custom_call.1} parent=1 // pred_check
      _
    $region79: #{tpu_custom_call.1} parent=1 // pred_check_branch
      %152 = sbr.rel (0) target = $region81
    $region80: #{tpu_custom_call.1} parent=1 // pred_region
      _
    $region81: #{tpu_custom_call.1} parent=1 // pred_fallthru
      _
    // Predicated region
    $region82: #{tpu_custom_call.1} parent=1 // pred_check
      _
    $region83: #{tpu_custom_call.1} parent=1 // pred_check_branch
      %154 = sbr.rel (0) target = $region85
    $region84: #{tpu_custom_call.1} parent=1 // pred_region
      _
    $region85: #{tpu_custom_call.1} parent=1 // pred_fallthru
      _
    // Predicated region
    $region86: #{tpu_custom_call.1} parent=1 // pred_check
      _
    $region87: #{tpu_custom_call.1} parent=1 // pred_check_branch
      %156 = sbr.rel (0) target = $region89
    $region88: #{tpu_custom_call.1} parent=1 // pred_region
      %157 = dma.done [#allocation3], 128
    $region89: #{tpu_custom_call.1} parent=1 // pred_fallthru
      _
    // Predicated region
    $region90: #{tpu_custom_call.1} parent=1 // pred_check
      _
    $region91: #{tpu_custom_call.1} parent=1 // pred_check_branch
      %159 = sbr.rel (0) target = $region93
    $region92: #{tpu_custom_call.1} parent=1 // pred_region
      %160 = dma.done [#allocation6], 256
    $region93: #{tpu_custom_call.1} parent=1 // pred_fallthru
      _
    // Predicated region
    $region94: #{tpu_custom_call.1} parent=1 // pred_check
      _
    $region95: #{tpu_custom_call.1} parent=1 // pred_check_branch
      %162 = sbr.rel (0) target = $region97
    $region96: #{tpu_custom_call.1} parent=1 // pred_region
      %163 = dma.done [#allocation6], 1024
    $region97: #{tpu_custom_call.1} parent=1 // pred_fallthru
      _
    // Predicated region
    $region98: #{tpu_custom_call.1} parent=1 // pred_check
      _
    $region99: #{tpu_custom_call.1} parent=1 // pred_check_branch
      %165 = sbr.rel (0) target = $region101
    $region100: #{tpu_custom_call.1} parent=1 // pred_region
      %166 = dma.done [#allocation9], 1024
    $region101: #{tpu_custom_call.1} parent=1 // pred_fallthru
      _
    // Predicated region
    $region102: #{tpu_custom_call.1} parent=1 // pred_check
      _
    $region103: #{tpu_custom_call.1} parent=1 // pred_check_branch
      %168 = sbr.rel (0) target = $region105
    $region104: #{tpu_custom_call.1} parent=1 // pred_region
      %169 = dma.done [#allocation9], 1024
    $region105: #{tpu_custom_call.1} parent=1 // pred_fallthru
      _
    // Predicated region
    $region106: #{tpu_custom_call.1} parent=1 // pred_check
      _
    $region107: #{tpu_custom_call.1} parent=1 // pred_check_branch
      %171 = sbr.rel (0) target = $region109
    $region108: #{tpu_custom_call.1} parent=1 // pred_region
      %172 = dma.done [#allocation12], 16
    $region109: #{tpu_custom_call.1} parent=1 // pred_fallthru
      _
    // Predicated region
    $region110: #{tpu_custom_call.1} parent=1 // pred_check
      _
    $region111: #{tpu_custom_call.1} parent=1 // pred_check_branch
      %174 = sbr.rel (0) target = $region113
    $region112: #{tpu_custom_call.1} parent=1 // pred_region
      %175 = dma.done [#allocation12], 1024
    $region113: #{tpu_custom_call.1} parent=1 // pred_fallthru
      _
    // Predicated region
    $region114: #{tpu_custom_call.1} parent=1 // pred_check
      _
    $region115: #{tpu_custom_call.1} parent=1 // pred_check_branch
      %177 = sbr.rel (0) target = $region117
    $region116: #{tpu_custom_call.1} parent=1 // pred_region
      %178 = dma.done [#allocation15], 1024
    $region117: #{tpu_custom_call.1} parent=1 // pred_fallthru
      _
    %v180 = vld [vmem:[#allocation2] sm:$0xf]
    %v181 = vld [vmem:[#allocation2 + $0x4] sm:$0xf]
    %v182 = vld [vmem:[#allocation5] sm:$0xf]
    %v183 = vld [vmem:[#allocation5 + $0x4] sm:$0xf]
    %v184 = vld [vmem:[#allocation5 + $0x8] sm:$0xf]
    %v185 = vld [vmem:[#allocation5 + $0xc] sm:$0xf]
    %v186 = vld [vmem:[%s2] sm:$0xf]
    %v187 = vld [vmem:[%s2 + $0x4] sm:$0xf]
    %v188 = vld [vmem:[%s2 + $0x8] sm:$0xf]
    %v189 = vld [vmem:[%s2 + $0xc] sm:$0xf]
    %v194 = vunpack.c.l.b16 %v186
    %v195 = vunpack.c.l.b16 %v187
    %v196 = vunpack.c.l.b16 %v188
    %v197 = vunpack.c.l.b16 %v189
    %v198 = vpack.c.b16 %v195, %v194
    %v199 = vpack.c.b16 %v197, %v196
    %v202 = vunpack.c.l.b16 %v180
    %v203 = vunpack.c.l.b16 %v181
    %v204 = vpack.c.b16 %v203, %v202
    %vm206 = vcmask 130048
    %v208 = vsel %vm206, %v198, 0
    %v211 = vsel %vm206, %v199, 0
    %213 = vmatprep.subr.bf16.mxu0 0
    %214 = vmatpush1.bf16.msra.mxu0 %v204
    %215 = vmatprep.subr.bf16.mxu0 0
    %216 = vmatpush1.bf16.msra.mxu0 0
    %217 = vmatprep.subr.bf16.mxu0 0
    %218 = vmatpush1.bf16.msra.mxu0 0
    %219 = vmatprep.subr.bf16.mxu0 0
    %220 = vmatpush1.bf16.msra.mxu0 0
    %221 = vmatprep.subr.bf16.mxu0 0
    %222 = vmatpush1.bf16.msra.mxu0 0
    %223 = vmatprep.subr.bf16.mxu0 0
    %224 = vmatpush1.bf16.msra.mxu0 0
    %225 = vmatprep.subr.bf16.mxu0 0
    %226 = vmatpush1.bf16.msra.mxu0 0
    %227 = vmatprep.subr.bf16.mxu0 0
    %228 = vmatpush1.bf16.msra.mxu0 0
    %229 = vmatprep.subr.bf16.mxu0 0
    %230 = vmatpush1.bf16.msra.mxu0 0
    %231 = vmatprep.subr.bf16.mxu0 0
    %232 = vmatpush1.bf16.msra.mxu0 0
    %233 = vmatprep.subr.bf16.mxu0 0
    %234 = vmatpush1.bf16.msra.mxu0 0
    %235 = vmatprep.subr.bf16.mxu0 0
    %236 = vmatpush1.bf16.msra.mxu0 0
    %237 = vmatprep.subr.bf16.mxu0 0
    %238 = vmatpush1.bf16.msra.mxu0 0
    %239 = vmatprep.subr.bf16.mxu0 0
    %240 = vmatpush1.bf16.msra.mxu0 0
    %241 = vmatprep.subr.bf16.mxu0 0
    %242 = vmatpush1.bf16.msra.mxu0 0
    %243 = vmatprep.subr.bf16.mxu0 0
    %244 = vmatpush1.bf16.msra.mxu0 0
    %245 = vmatprep.mubr.bf16.mxu0 0
    %246 = vmatmul.mubr.bf16.gmra.mrb[0].mxu0 %v208
    %v247 = vpop.f32.mrb[0].mxu0
    %v248 = vadd.f32 0.0, %v247
    %v249 = vpop.f32.mrb[0].mxu0
    %v250 = vpop.f32.mrb[0].mxu0
    %v251 = vadd.f32 0.0, %v250
    %v252 = vpop.f32.mrb[0].mxu0
    %253 = vmatprep.mubr.bf16.mxu0 0
    %254 = vmatmul.mubr.bf16.gmra.mrb[0].mxu0 %v211
    %v255 = vpop.f32.mrb[0].mxu0
    %v256 = vadd.f32 0.0, %v255
    %v257 = vpop.f32.mrb[0].mxu0
    %v258 = vpop.f32.mrb[0].mxu0
    %v259 = vadd.f32 0.0, %v258
    %v260 = vpop.f32.mrb[0].mxu0
    %261 = vdwg.mxu0
    %v262 = vpack.c.bf16 %v251, %v248
    %v263 = vpack.c.bf16 %v259, %v256
    %v264 = vld [vmem:[#allocation7] sm:$0xf]
    %v265 = vld [vmem:[#allocation7 + $0x4] sm:$0xf]
    %v266 = vld [vmem:[#allocation7 + $0x8] sm:$0xf]
    %v267 = vld [vmem:[#allocation7 + $0xc] sm:$0xf]
    %v268 = vld [vmem:[#allocation7 + $0x10] sm:$0xf]
    %v269 = vld [vmem:[#allocation7 + $0x14] sm:$0xf]
    %v270 = vld [vmem:[#allocation7 + $0x18] sm:$0xf]
    %v271 = vld [vmem:[#allocation7 + $0x1c] sm:$0xf]
    %v272 = vld [vmem:[#allocation7 + $0x20] sm:$0xf]
    %v273 = vld [vmem:[#allocation7 + $0x24] sm:$0xf]
    %v274 = vld [vmem:[#allocation7 + $0x28] sm:$0xf]
    %v275 = vld [vmem:[#allocation7 + $0x2c] sm:$0xf]
    %v276 = vld [vmem:[#allocation7 + $0x30] sm:$0xf]
    %v277 = vld [vmem:[#allocation7 + $0x34] sm:$0xf]
    %v278 = vld [vmem:[#allocation7 + $0x38] sm:$0xf]
    %v279 = vld [vmem:[#allocation7 + $0x3c] sm:$0xf]
    %v280 = vld [vmem:[#allocation8] sm:$0xf]
    %v281 = vld [vmem:[#allocation8 + $0x4] sm:$0xf]
    %v282 = vld [vmem:[#allocation8 + $0x8] sm:$0xf]
    %v283 = vld [vmem:[#allocation8 + $0xc] sm:$0xf]
    %v284 = vld [vmem:[#allocation8 + $0x10] sm:$0xf]
    %v285 = vld [vmem:[#allocation8 + $0x14] sm:$0xf]
    %v286 = vld [vmem:[#allocation8 + $0x18] sm:$0xf]
    %v287 = vld [vmem:[#allocation8 + $0x1c] sm:$0xf]
    %v288 = vld [vmem:[#allocation8 + $0x20] sm:$0xf]
    %v289 = vld [vmem:[#allocation8 + $0x24] sm:$0xf]
    %v290 = vld [vmem:[#allocation8 + $0x28] sm:$0xf]
    %v291 = vld [vmem:[#allocation8 + $0x2c] sm:$0xf]
    %v292 = vld [vmem:[#allocation8 + $0x30] sm:$0xf]
    %v293 = vld [vmem:[#allocation8 + $0x34] sm:$0xf]
    %v294 = vld [vmem:[#allocation8 + $0x38] sm:$0xf]
    %v295 = vld [vmem:[#allocation8 + $0x3c] sm:$0xf]
    %v296 = vld [vmem:[%s5] sm:$0x1]
    %v297 = vld [vmem:[%s6] sm:$0x1]
    %v298 = vld [vmem:[%s7] sm:$0x1]
    %v299 = vld [vmem:[#allocation10] sm:$0xf]
    %v300 = vld [vmem:[#allocation10 + $0x4] sm:$0xf]
    %v301 = vld [vmem:[#allocation10 + $0x8] sm:$0xf]
    %v302 = vld [vmem:[#allocation10 + $0xc] sm:$0xf]
    %v303 = vld [vmem:[#allocation10 + $0x10] sm:$0xf]
    %v304 = vld [vmem:[#allocation10 + $0x14] sm:$0xf]
    %v305 = vld [vmem:[#allocation10 + $0x18] sm:$0xf]
    %v306 = vld [vmem:[#allocation10 + $0x1c] sm:$0xf]
    %v307 = vld [vmem:[#allocation10 + $0x20] sm:$0xf]
    %v308 = vld [vmem:[#allocation10 + $0x24] sm:$0xf]
    %v309 = vld [vmem:[#allocation10 + $0x28] sm:$0xf]
    %v310 = vld [vmem:[#allocation10 + $0x2c] sm:$0xf]
    %v311 = vld [vmem:[#allocation10 + $0x30] sm:$0xf]
    %v312 = vld [vmem:[#allocation10 + $0x34] sm:$0xf]
    %v313 = vld [vmem:[#allocation10 + $0x38] sm:$0xf]
    %v314 = vld [vmem:[#allocation10 + $0x3c] sm:$0xf]
    %v315 = vld [vmem:[%s9] sm:$0x1]
    %v316 = vld [vmem:[%s10] sm:$0x1]
    %v317 = vld [vmem:[#allocation11] sm:$0x1]
    %v334 = vunpack.c.l.b16 %v280
    %v335 = vunpack.c.l.b16 %v281
    %v336 = vunpack.c.l.b16 %v282
    %v337 = vunpack.c.l.b16 %v283
    %v338 = vunpack.c.l.b16 %v284
    %v339 = vunpack.c.l.b16 %v285
    %v340 = vunpack.c.l.b16 %v286
    %v341 = vunpack.c.l.b16 %v287
    %v342 = vunpack.c.l.b16 %v288
    %v343 = vunpack.c.l.b16 %v289
    %v344 = vunpack.c.l.b16 %v290
    %v345 = vunpack.c.l.b16 %v291
    %v346 = vunpack.c.l.b16 %v292
    %v347 = vunpack.c.l.b16 %v293
    %v348 = vunpack.c.l.b16 %v294
    %v349 = vunpack.c.l.b16 %v295
    %v350 = vpack.c.b16 %v335, %v334
    %v351 = vpack.c.b16 %v337, %v336
    %v352 = vpack.c.b16 %v339, %v338
    %v353 = vpack.c.b16 %v341, %v340
    %v354 = vpack.c.b16 %v343, %v342
    %v355 = vpack.c.b16 %v345, %v344
    %v356 = vpack.c.b16 %v347, %v346
    %v357 = vpack.c.b16 %v349, %v348
    %366 = vmatprep.subr.bf16.mxu0 0
    %367 = vmatpush1.bf16.msra.mxu0 %v350
    %368 = vmatprep.subr.bf16.mxu0 0
    %369 = vmatpush1.bf16.msra.mxu0 %v351
    %370 = vmatprep.subr.bf16.mxu0 0
    %371 = vmatpush1.bf16.msra.mxu0 %v352
    %372 = vmatprep.subr.bf16.mxu0 0
    %373 = vmatpush1.bf16.msra.mxu0 %v353
    %374 = vmatprep.subr.bf16.mxu0 0
    %375 = vmatpush1.bf16.msra.mxu0 %v354
    %376 = vmatprep.subr.bf16.mxu0 0
    %377 = vmatpush1.bf16.msra.mxu0 %v355
    %378 = vmatprep.subr.bf16.mxu0 0
    %379 = vmatpush1.bf16.msra.mxu0 %v356
    %380 = vmatprep.subr.bf16.mxu0 0
    %381 = vmatpush1.bf16.msra.mxu0 %v357
    %382 = vmatprep.subr.bf16.mxu0 0
    %383 = vmatpush1.bf16.msra.mxu0 0
    %384 = vmatprep.subr.bf16.mxu0 0
    %385 = vmatpush1.bf16.msra.mxu0 0
    %386 = vmatprep.subr.bf16.mxu0 0
    %387 = vmatpush1.bf16.msra.mxu0 0
    %388 = vmatprep.subr.bf16.mxu0 0
    %389 = vmatpush1.bf16.msra.mxu0 0
    %390 = vmatprep.subr.bf16.mxu0 0
    %391 = vmatpush1.bf16.msra.mxu0 0
    %392 = vmatprep.subr.bf16.mxu0 0
    %393 = vmatpush1.bf16.msra.mxu0 0
    %394 = vmatprep.subr.bf16.mxu0 0
    %395 = vmatpush1.bf16.msra.mxu0 0
    %396 = vmatprep.subr.bf16.mxu0 0
    %397 = vmatpush1.bf16.msra.mxu0 0
    %398 = vmatprep.mubr.bf16.mxu0 0
    %399 = vmatmul.mubr.bf16.gmra.mrb[0].mxu0 %v262
    %v400 = vpop.f32.mrb[0].mxu0
    %v401 = vadd.f32 0.0, %v400
    %v402 = vpop.f32.mrb[0].mxu0
    %v403 = vpop.f32.mrb[0].mxu0
    %v404 = vadd.f32 0.0, %v403
    %v405 = vpop.f32.mrb[0].mxu0
    %406 = vmatprep.mubr.bf16.mxu0 0
    %407 = vmatmul.mubr.bf16.gmra.mrb[0].mxu0 %v263
    %v408 = vpop.f32.mrb[0].mxu0
    %v409 = vadd.f32 0.0, %v408
    %v410 = vpop.f32.mrb[0].mxu0
    %v411 = vpop.f32.mrb[0].mxu0
    %v412 = vadd.f32 0.0, %v411
    %v413 = vpop.f32.mrb[0].mxu0
    %414 = vdwg.mxu0
    %v419 = vunpack.c.l.b16 %v182
    %v420 = vunpack.c.l.b16 %v183
    %v421 = vunpack.c.l.b16 %v184
    %v422 = vunpack.c.l.b16 %v185
    %v423 = vpack.c.b16 %v420, %v419
    %v424 = vpack.c.b16 %v422, %v421
    %v443 = vunpack.c.l.b16 %v264
    %v444 = vunpack.c.l.b16 %v265
    %v445 = vunpack.c.l.b16 %v266
    %v446 = vunpack.c.l.b16 %v267
    %v447 = vunpack.c.l.b16 %v268
    %v448 = vunpack.c.l.b16 %v269
    %v449 = vunpack.c.l.b16 %v270
    %v450 = vunpack.c.l.b16 %v271
    %v451 = vunpack.c.l.b16 %v272
    %v452 = vunpack.c.l.b16 %v273
    %v453 = vunpack.c.l.b16 %v274
    %v454 = vunpack.c.l.b16 %v275
    %v455 = vunpack.c.l.b16 %v276
    %v456 = vunpack.c.l.b16 %v277
    %v457 = vunpack.c.l.b16 %v278
    %v458 = vunpack.c.l.b16 %v279
    %v459 = vpack.c.b16 %v444, %v443
    %v460 = vpack.c.b16 %v446, %v445
    %v461 = vpack.c.b16 %v448, %v447
    %v462 = vpack.c.b16 %v450, %v449
    %v463 = vpack.c.b16 %v452, %v451
    %v464 = vpack.c.b16 %v454, %v453
    %v465 = vpack.c.b16 %v456, %v455
    %v466 = vpack.c.b16 %v458, %v457
    %475 = vmatprep.subr.bf16.mxu0 0
    %476 = vmatpush1.bf16.msra.mxu0 %v459
    %477 = vmatprep.subr.bf16.mxu0 0
    %478 = vmatpush1.bf16.msra.mxu0 %v460
    %479 = vmatprep.subr.bf16.mxu0 0
    %480 = vmatpush1.bf16.msra.mxu0 %v461
    %481 = vmatprep.subr.bf16.mxu0 0
    %482 = vmatpush1.bf16.msra.mxu0 %v462
    %483 = vmatprep.subr.bf16.mxu0 0
    %484 = vmatpush1.bf16.msra.mxu0 %v463
    %485 = vmatprep.subr.bf16.mxu0 0
    %486 = vmatpush1.bf16.msra.mxu0 %v464
    %487 = vmatprep.subr.bf16.mxu0 0
    %488 = vmatpush1.bf16.msra.mxu0 %v465
    %489 = vmatprep.subr.bf16.mxu0 0
    %490 = vmatpush1.bf16.msra.mxu0 %v466
    %491 = vmatprep.subr.bf16.mxu0 0
    %492 = vmatpush1.bf16.msra.mxu0 0
    %493 = vmatprep.subr.bf16.mxu0 0
    %494 = vmatpush1.bf16.msra.mxu0 0
    %495 = vmatprep.subr.bf16.mxu0 0
    %496 = vmatpush1.bf16.msra.mxu0 0
    %497 = vmatprep.subr.bf16.mxu0 0
    %498 = vmatpush1.bf16.msra.mxu0 0
    %499 = vmatprep.subr.bf16.mxu0 0
    %500 = vmatpush1.bf16.msra.mxu0 0
    %501 = vmatprep.subr.bf16.mxu0 0
    %502 = vmatpush1.bf16.msra.mxu0 0
    %503 = vmatprep.subr.bf16.mxu0 0
    %504 = vmatpush1.bf16.msra.mxu0 0
    %505 = vmatprep.subr.bf16.mxu0 0
    %506 = vmatpush1.bf16.msra.mxu0 0
    %507 = vmatprep.mubr.bf16.mxu0 0
    %508 = vmatmul.mubr.bf16.gmra.mrb[0].mxu0 %v423
    %v509 = vpop.f32.mrb[0].mxu0
    %v510 = vadd.f32 %v401, %v509
    %v511 = vpop.f32.mrb[0].mxu0
    %v512 = vpop.f32.mrb[0].mxu0
    %v513 = vadd.f32 %v404, %v512
    %v514 = vpop.f32.mrb[0].mxu0
    %515 = vmatprep.mubr.bf16.mxu0 0
    %516 = vmatmul.mubr.bf16.gmra.mrb[0].mxu0 %v424
    %v517 = vpop.f32.mrb[0].mxu0
    %v518 = vadd.f32 %v409, %v517
    %v519 = vpop.f32.mrb[0].mxu0
    %v520 = vpop.f32.mrb[0].mxu0
    %v521 = vadd.f32 %v412, %v520
    %v522 = vpop.f32.mrb[0].mxu0
    %523 = vdwg.mxu0
    %v525 = vlaneseq
    %v526 = vshrl.u32 %v525, 7
    %v527 = vsub.s32 0, %v526
    %v528 = vrot.slane %v296, %v527
    %v530 = vadd.f32 %v510, %v528
    %v531 = vadd.f32 %v513, %v528
    %v532 = vadd.f32 %v518, %v528
    %v533 = vadd.f32 %v521, %v528
    %v534 = vadd.f32 %v530, %v531
    %v535 = vadd.f32 %v534, %v532
    %v536 = vadd.f32 %v535, %v533
    %v537 = vrot.slane %v536, 4
    %v538 = vadd.f32 %v536, %v537
    %v539 = vrot.slane %v538, 2
    %v540 = vadd.f32 %v538, %v539
    %v541 = vrot.slane %v540, 1
    %v542 = vadd.f32 %v540, %v541
    %v543 = vrcp.pop 32.0
    %v544 = vmul.f32 %v542, %v543
    %v545 = vsub.f32 %v530, %v544
    %v546 = vsub.f32 %v531, %v544
    %v547 = vsub.f32 %v532, %v544
    %v548 = vsub.f32 %v533, %v544
    %v549 = vmul.f32 %v545, %v545
    %v550 = vmul.f32 %v546, %v546
    %v551 = vmul.f32 %v547, %v547
    %v552 = vmul.f32 %v548, %v548
    %v553 = vadd.f32 %v549, %v550
    %v554 = vadd.f32 %v553, %v551
    %v555 = vadd.f32 %v554, %v552
    %v556 = vrot.slane %v555, 4
    %v557 = vadd.f32 %v555, %v556
    %v558 = vrot.slane %v557, 2
    %v559 = vadd.f32 %v557, %v558
    %v560 = vrot.slane %v559, 1
    %v561 = vadd.f32 %v559, %v560
    %v562 = vmul.f32 %v561, %v543
    %v563 = vadd.f32 %v562, 1e-05
    %v564 = vrsqrt.pop %v563
    %v565 = vmul.f32 %v545, %v564
    %v566 = vmul.f32 %v546, %v564
    %v567 = vmul.f32 %v547, %v564
    %v568 = vmul.f32 %v548, %v564
    %v570 = vlaneseq
    %v571 = vshrl.u32 %v570, 7
    %v572 = vsub.s32 0, %v571
    %v573 = vrot.slane %v297, %v572
    %v575 = vmul.f32 %v565, %v573
    %v576 = vmul.f32 %v566, %v573
    %v577 = vmul.f32 %v567, %v573
    %v578 = vmul.f32 %v568, %v573
    %v580 = vlaneseq
    %v581 = vshrl.u32 %v580, 7
    %v582 = vsub.s32 0, %v581
    %v583 = vrot.slane %v298, %v582
    %v585 = vadd.f32 %v575, %v583
    %v586 = vadd.f32 %v576, %v583
    %v587 = vadd.f32 %v577, %v583
    %v588 = vadd.f32 %v578, %v583
    %v589 = vmax.f32 %v585, 0.0
    %v590 = vmax.f32 %v586, 0.0
    %v591 = vmax.f32 %v587, 0.0
    %v592 = vmax.f32 %v588, 0.0
    %v593 = vpack.c.bf16 %v590, %v589
    %v594 = vpack.c.bf16 %v592, %v591
    %v596 = vlaneseq
    %v597 = vshrl.u32 %v596, 7
    %v598 = vsub.s32 0, %v597
    %v599 = vrot.slane %v315, %v598
    %v617 = vunpack.c.l.b16 %v299
    %v618 = vunpack.c.l.b16 %v300
    %v619 = vunpack.c.l.b16 %v301
    %v620 = vunpack.c.l.b16 %v302
    %v621 = vunpack.c.l.b16 %v303
    %v622 = vunpack.c.l.b16 %v304
    %v623 = vunpack.c.l.b16 %v305
    %v624 = vunpack.c.l.b16 %v306
    %v625 = vunpack.c.l.b16 %v307
    %v626 = vunpack.c.l.b16 %v308
    %v627 = vunpack.c.l.b16 %v309
    %v628 = vunpack.c.l.b16 %v310
    %v629 = vunpack.c.l.b16 %v311
    %v630 = vunpack.c.l.b16 %v312
    %v631 = vunpack.c.l.b16 %v313
    %v632 = vunpack.c.l.b16 %v314
    %v633 = vpack.c.b16 %v618, %v617
    %v634 = vpack.c.b16 %v620, %v619
    %v635 = vpack.c.b16 %v622, %v621
    %v636 = vpack.c.b16 %v624, %v623
    %v637 = vpack.c.b16 %v626, %v625
    %v638 = vpack.c.b16 %v628, %v627
    %v639 = vpack.c.b16 %v630, %v629
    %v640 = vpack.c.b16 %v632, %v631
    %649 = vmatprep.subr.bf16.mxu0 0
    %650 = vmatpush1.bf16.msra.mxu0 %v633
    %651 = vmatprep.subr.bf16.mxu0 0
    %652 = vmatpush1.bf16.msra.mxu0 %v634
    %653 = vmatprep.subr.bf16.mxu0 0
    %654 = vmatpush1.bf16.msra.mxu0 %v635
    %655 = vmatprep.subr.bf16.mxu0 0
    %656 = vmatpush1.bf16.msra.mxu0 %v636
    %657 = vmatprep.subr.bf16.mxu0 0
    %658 = vmatpush1.bf16.msra.mxu0 %v637
    %659 = vmatprep.subr.bf16.mxu0 0
    %660 = vmatpush1.bf16.msra.mxu0 %v638
    %661 = vmatprep.subr.bf16.mxu0 0
    %662 = vmatpush1.bf16.msra.mxu0 %v639
    %663 = vmatprep.subr.bf16.mxu0 0
    %664 = vmatpush1.bf16.msra.mxu0 %v640
    %665 = vmatprep.subr.bf16.mxu0 0
    %666 = vmatpush1.bf16.msra.mxu0 0
    %667 = vmatprep.subr.bf16.mxu0 0
    %668 = vmatpush1.bf16.msra.mxu0 0
    %669 = vmatprep.subr.bf16.mxu0 0
    %670 = vmatpush1.bf16.msra.mxu0 0
    %671 = vmatprep.subr.bf16.mxu0 0
    %672 = vmatpush1.bf16.msra.mxu0 0
    %673 = vmatprep.subr.bf16.mxu0 0
    %674 = vmatpush1.bf16.msra.mxu0 0
    %675 = vmatprep.subr.bf16.mxu0 0
    %676 = vmatpush1.bf16.msra.mxu0 0
    %677 = vmatprep.subr.bf16.mxu0 0
    %678 = vmatpush1.bf16.msra.mxu0 0
    %679 = vmatprep.subr.bf16.mxu0 0
    %680 = vmatpush1.bf16.msra.mxu0 0
    %681 = vmatprep.mubr.bf16.mxu0 0
    %682 = vmatmul.mubr.bf16.gmra.mrb[0].mxu0 %v593
    %v683 = vpop.f32.mrb[0].mxu0
    %v684 = vadd.f32 %v599, %v683
    %v685 = vpop.f32.mrb[0].mxu0
    %v686 = vpop.f32.mrb[0].mxu0
    %v687 = vadd.f32 %v599, %v686
    %v688 = vpop.f32.mrb[0].mxu0
    %689 = vmatprep.mubr.bf16.mxu0 0
    %690 = vmatmul.mubr.bf16.gmra.mrb[0].mxu0 %v594
    %v691 = vpop.f32.mrb[0].mxu0
    %v692 = vadd.f32 %v599, %v691
    %v693 = vpop.f32.mrb[0].mxu0
    %v694 = vpop.f32.mrb[0].mxu0
    %v695 = vadd.f32 %v599, %v694
    %v696 = vpop.f32.mrb[0].mxu0
    %697 = vdwg.mxu0
    %v698 = vadd.f32 %v684, %v687
    %v699 = vadd.f32 %v698, %v692
    %v700 = vadd.f32 %v699, %v695
    %v701 = vrot.slane %v700, 4
    %v702 = vadd.f32 %v700, %v701
    %v703 = vrot.slane %v702, 2
    %v704 = vadd.f32 %v702, %v703
    %v705 = vrot.slane %v704, 1
    %v706 = vadd.f32 %v704, %v705
    %v707 = vmul.f32 %v706, %v543
    %v708 = vsub.f32 %v684, %v707
    %v709 = vsub.f32 %v687, %v707
    %v710 = vsub.f32 %v692, %v707
    %v711 = vsub.f32 %v695, %v707
    %v712 = vmul.f32 %v708, %v708
    %v713 = vmul.f32 %v709, %v709
    %v714 = vmul.f32 %v710, %v710
    %v715 = vmul.f32 %v711, %v711
    %v716 = vadd.f32 %v712, %v713
    %v717 = vadd.f32 %v716, %v714
    %v718 = vadd.f32 %v717, %v715
    %v719 = vrot.slane %v718, 4
    %v720 = vadd.f32 %v718, %v719
    %v721 = vrot.slane %v720, 2
    %v722 = vadd.f32 %v720, %v721
    %v723 = vrot.slane %v722, 1
    %v724 = vadd.f32 %v722, %v723
    %v725 = vmul.f32 %v724, %v543
    %v726 = vadd.f32 %v725, 1e-05
    %v727 = vrsqrt.pop %v726
    %v728 = vmul.f32 %v708, %v727
    %v729 = vmul.f32 %v709, %v727
    %v730 = vmul.f32 %v710, %v727
    %v731 = vmul.f32 %v711, %v727
    %v733 = vlaneseq
    %v734 = vshrl.u32 %v733, 7
    %v735 = vsub.s32 0, %v734
    %v736 = vrot.slane %v316, %v735
    %v738 = vmul.f32 %v728, %v736
    %v739 = vmul.f32 %v729, %v736
    %v740 = vmul.f32 %v730, %v736
    %v741 = vmul.f32 %v731, %v736
    %v743 = vlaneseq
    %v744 = vshrl.u32 %v743, 7
    %v745 = vsub.s32 0, %v744
    %v746 = vrot.slane %v317, %v745
    %v748 = vadd.f32 %v738, %v746
    %v749 = vadd.f32 %v739, %v746
    %v750 = vadd.f32 %v740, %v746
    %v751 = vadd.f32 %v741, %v746
    %v752 = vmax.f32 %v748, 0.0
    %v753 = vmax.f32 %v749, 0.0
    %v754 = vmax.f32 %v750, 0.0
    %v755 = vmax.f32 %v751, 0.0
    %756 = vst [vmem:[#allocation17] sm:$0xff] %v752
    %757 = vst [vmem:[#allocation17 + $0x8] sm:$0xff] %v753
    %758 = vst [vmem:[#allocation17 + $0x10] sm:$0xff] %v754
    %759 = vst [vmem:[#allocation17 + $0x18] sm:$0xff] %v755
    %v760 = vpack.c.bf16 %v753, %v752
    %v761 = vpack.c.bf16 %v755, %v754
    %764 = vxpose.xlu0.c.b16.start [1/8] %v198, 128
    %765 = vxpose.xlu0.c.b16.cont [2/8] %v199, 128
    %766 = vxpose.xlu0.c.b16.cont [3/8] 0, 128
    %767 = vxpose.xlu0.c.b16.cont [4/8] 0, 128
    %768 = vxpose.xlu0.c.b16.cont [5/8] 0, 128
    %769 = vxpose.xlu0.c.b16.cont [6/8] 0, 128
    %770 = vxpose.xlu0.c.b16.cont [7/8] 0, 128
    %771 = vxpose.xlu0.c.b16.end [8/8] 0, 128
    %v772 = vpop.trf.xlu0
    %v773 = vpop.trf.xlu0
    %v774 = vpop.trf.xlu0
    %v775 = vpop.trf.xlu0
    %v776 = vpop.trf.xlu0
    %v777 = vpop.trf.xlu0
    %v778 = vpop.trf.xlu0
    %v779 = vpop.trf.xlu0
    %vm780 = vcmask 261120
    %v782 = vsel %vm780, %v772, 0
    %784 = vmatprep.subr.bf16.mxu0 0
    %785 = vmatpush1.bf16.msra.mxu0 %v760
    %786 = vmatprep.subr.bf16.mxu0 0
    %787 = vmatpush1.bf16.msra.mxu0 %v761
    %788 = vmatprep.subr.bf16.mxu0 0
    %789 = vmatpush1.bf16.msra.mxu0 0
    %790 = vmatprep.subr.bf16.mxu0 0
    %791 = vmatpush1.bf16.msra.mxu0 0
    %792 = vmatprep.subr.bf16.mxu0 0
    %793 = vmatpush1.bf16.msra.mxu0 0
    %794 = vmatprep.subr.bf16.mxu0 0
    %795 = vmatpush1.bf16.msra.mxu0 0
    %796 = vmatprep.subr.bf16.mxu0 0
    %797 = vmatpush1.bf16.msra.mxu0 0
    %798 = vmatprep.subr.bf16.mxu0 0
    %799 = vmatpush1.bf16.msra.mxu0 0
    %800 = vmatprep.subr.bf16.mxu0 0
    %801 = vmatpush1.bf16.msra.mxu0 0
    %802 = vmatprep.subr.bf16.mxu0 0
    %803 = vmatpush1.bf16.msra.mxu0 0
    %804 = vmatprep.subr.bf16.mxu0 0
    %805 = vmatpush1.bf16.msra.mxu0 0
    %806 = vmatprep.subr.bf16.mxu0 0
    %807 = vmatpush1.bf16.msra.mxu0 0
    %808 = vmatprep.subr.bf16.mxu0 0
    %809 = vmatpush1.bf16.msra.mxu0 0
    %810 = vmatprep.subr.bf16.mxu0 0
    %811 = vmatpush1.bf16.msra.mxu0 0
    %812 = vmatprep.subr.bf16.mxu0 0
    %813 = vmatpush1.bf16.msra.mxu0 0
    %814 = vmatprep.subr.bf16.mxu0 0
    %815 = vmatpush1.bf16.msra.mxu0 0
    %816 = vmatprep.mubr.bf16.mxu0 0
    %817 = vmatmul.mubr.bf16.gmra.mrb[0].mxu0 %v782
    %v818 = vpop.f32.mrb[0].mxu0
    %v819 = vadd.f32 0.0, %v818
    %v820 = vpop.f32.mrb[0].mxu0
    %v821 = vpop.f32.mrb[0].mxu0
    %v822 = vadd.f32 0.0, %v821
    %v823 = vpop.f32.mrb[0].mxu0
    %824 = vdwg.mxu0
    %v825 = vpack.c.bf16 %v822, %v819
    %v826 = vld [vmem:[%s12] sm:$0xf]
    %v827 = vld [vmem:[%s12 + $0x4] sm:$0xf]
    %v828 = vld [vmem:[%s12 + $0x8] sm:$0xf]
    %v829 = vld [vmem:[%s12 + $0xc] sm:$0xf]
    %v830 = vld [vmem:[%s12 + $0x10] sm:$0xf]
    %v831 = vld [vmem:[%s12 + $0x14] sm:$0xf]
    %v832 = vld [vmem:[%s12 + $0x18] sm:$0xf]
    %v833 = vld [vmem:[%s12 + $0x1c] sm:$0xf]
    %v834 = vld [vmem:[%s12 + $0x20] sm:$0xf]
    %v835 = vld [vmem:[%s12 + $0x24] sm:$0xf]
    %v836 = vld [vmem:[%s12 + $0x28] sm:$0xf]
    %v837 = vld [vmem:[%s12 + $0x2c] sm:$0xf]
    %v838 = vld [vmem:[%s12 + $0x30] sm:$0xf]
    %v839 = vld [vmem:[%s12 + $0x34] sm:$0xf]
    %v840 = vld [vmem:[%s12 + $0x38] sm:$0xf]
    %v841 = vld [vmem:[%s12 + $0x3c] sm:$0xf]
    %v842 = vld [vmem:[#allocation13] sm:$0xf]
    %v843 = vld [vmem:[#allocation13 + $0x4] sm:$0xf]
    %v844 = vld [vmem:[#allocation13 + $0x8] sm:$0xf]
    %v845 = vld [vmem:[#allocation13 + $0xc] sm:$0xf]
    %v846 = vld [vmem:[#allocation13 + $0x10] sm:$0xf]
    %v847 = vld [vmem:[#allocation13 + $0x14] sm:$0xf]
    %v848 = vld [vmem:[#allocation13 + $0x18] sm:$0xf]
    %v849 = vld [vmem:[#allocation13 + $0x1c] sm:$0xf]
    %v850 = vld [vmem:[#allocation13 + $0x20] sm:$0xf]
    %v851 = vld [vmem:[#allocation13 + $0x24] sm:$0xf]
    %v852 = vld [vmem:[#allocation13 + $0x28] sm:$0xf]
    %v853 = vld [vmem:[#allocation13 + $0x2c] sm:$0xf]
    %v854 = vld [vmem:[#allocation13 + $0x30] sm:$0xf]
    %v855 = vld [vmem:[#allocation13 + $0x34] sm:$0xf]
    %v856 = vld [vmem:[#allocation13 + $0x38] sm:$0xf]
    %v857 = vld [vmem:[#allocation13 + $0x3c] sm:$0xf]
    %v858 = vld [vmem:[%s14] sm:$0x1]
    %v859 = vld [vmem:[%s15] sm:$0x1]
    %v860 = vld [vmem:[%s16] sm:$0x1]
    %v861 = vld [vmem:[#allocation14] sm:$0xf]
    %v862 = vld [vmem:[#allocation14 + $0x4] sm:$0xf]
    %v863 = vld [vmem:[#allocation14 + $0x8] sm:$0xf]
    %v864 = vld [vmem:[#allocation14 + $0xc] sm:$0xf]
    %v865 = vld [vmem:[#allocation14 + $0x10] sm:$0xf]
    %v866 = vld [vmem:[#allocation14 + $0x14] sm:$0xf]
    %v867 = vld [vmem:[#allocation14 + $0x18] sm:$0xf]
    %v868 = vld [vmem:[#allocation14 + $0x1c] sm:$0xf]
    %v869 = vld [vmem:[#allocation14 + $0x20] sm:$0xf]
    %v870 = vld [vmem:[#allocation14 + $0x24] sm:$0xf]
    %v871 = vld [vmem:[#allocation14 + $0x28] sm:$0xf]
    %v872 = vld [vmem:[#allocation14 + $0x2c] sm:$0xf]
    %v873 = vld [vmem:[#allocation14 + $0x30] sm:$0xf]
    %v874 = vld [vmem:[#allocation14 + $0x34] sm:$0xf]
    %v875 = vld [vmem:[#allocation14 + $0x38] sm:$0xf]
    %v876 = vld [vmem:[#allocation14 + $0x3c] sm:$0xf]
    %v877 = vld [vmem:[%s18] sm:$0x1]
    %v878 = vld [vmem:[%s19] sm:$0x1]
    %v879 = vld [vmem:[%s20] sm:$0x1]
    %v896 = vunpack.c.l.b16 %v842
    %v897 = vunpack.c.l.b16 %v843
    %v898 = vunpack.c.l.b16 %v844
    %v899 = vunpack.c.l.b16 %v845
    %v900 = vunpack.c.l.b16 %v846
    %v901 = vunpack.c.l.b16 %v847
    %v902 = vunpack.c.l.b16 %v848
    %v903 = vunpack.c.l.b16 %v849
    %v904 = vunpack.c.l.b16 %v850
    %v905 = vunpack.c.l.b16 %v851
    %v906 = vunpack.c.l.b16 %v852
    %v907 = vunpack.c.l.b16 %v853
    %v908 = vunpack.c.l.b16 %v854
    %v909 = vunpack.c.l.b16 %v855
    %v910 = vunpack.c.l.b16 %v856
    %v911 = vunpack.c.l.b16 %v857
    %v912 = vpack.c.b16 %v897, %v896
    %v913 = vpack.c.b16 %v899, %v898
    %v914 = vpack.c.b16 %v901, %v900
    %v915 = vpack.c.b16 %v903, %v902
    %v916 = vpack.c.b16 %v905, %v904
    %v917 = vpack.c.b16 %v907, %v906
    %v918 = vpack.c.b16 %v909, %v908
    %v919 = vpack.c.b16 %v911, %v910
    %928 = vmatprep.subr.bf16.mxu0 0
    %929 = vmatpush1.bf16.msra.mxu0 %v912
    %930 = vmatprep.subr.bf16.mxu0 0
    %931 = vmatpush1.bf16.msra.mxu0 %v913
    %932 = vmatprep.subr.bf16.mxu0 0
    %933 = vmatpush1.bf16.msra.mxu0 %v914
    %934 = vmatprep.subr.bf16.mxu0 0
    %935 = vmatpush1.bf16.msra.mxu0 %v915
    %936 = vmatprep.subr.bf16.mxu0 0
    %937 = vmatpush1.bf16.msra.mxu0 %v916
    %938 = vmatprep.subr.bf16.mxu0 0
    %939 = vmatpush1.bf16.msra.mxu0 %v917
    %940 = vmatprep.subr.bf16.mxu0 0
    %941 = vmatpush1.bf16.msra.mxu0 %v918
    %942 = vmatprep.subr.bf16.mxu0 0
    %943 = vmatpush1.bf16.msra.mxu0 %v919
    %944 = vmatprep.subr.bf16.mxu0 0
    %945 = vmatpush1.bf16.msra.mxu0 0
    %946 = vmatprep.subr.bf16.mxu0 0
    %947 = vmatpush1.bf16.msra.mxu0 0
    %948 = vmatprep.subr.bf16.mxu0 0
    %949 = vmatpush1.bf16.msra.mxu0 0
    %950 = vmatprep.subr.bf16.mxu0 0
    %951 = vmatpush1.bf16.msra.mxu0 0
    %952 = vmatprep.subr.bf16.mxu0 0
    %953 = vmatpush1.bf16.msra.mxu0 0
    %954 = vmatprep.subr.bf16.mxu0 0
    %955 = vmatpush1.bf16.msra.mxu0 0
    %956 = vmatprep.subr.bf16.mxu0 0
    %957 = vmatpush1.bf16.msra.mxu0 0
    %958 = vmatprep.subr.bf16.mxu0 0
    %959 = vmatpush1.bf16.msra.mxu0 0
    %960 = vmatprep.mubr.bf16.mxu0 0
    %961 = vmatmul.mubr.bf16.gmra.mrb[0].mxu0 %v825
    %v962 = vpop.f32.mrb[0].mxu0
    %v963 = vadd.f32 0.0, %v962
    %v964 = vpop.f32.mrb[0].mxu0
    %v965 = vpop.f32.mrb[0].mxu0
    %v966 = vadd.f32 0.0, %v965
    %v967 = vpop.f32.mrb[0].mxu0
    %968 = vdwg.mxu0
    %v985 = vunpack.c.l.b16 %v826
    %v986 = vunpack.c.l.b16 %v827
    %v987 = vunpack.c.l.b16 %v828
    %v988 = vunpack.c.l.b16 %v829
    %v989 = vunpack.c.l.b16 %v830
    %v990 = vunpack.c.l.b16 %v831
    %v991 = vunpack.c.l.b16 %v832
    %v992 = vunpack.c.l.b16 %v833
    %v993 = vunpack.c.l.b16 %v834
    %v994 = vunpack.c.l.b16 %v835
    %v995 = vunpack.c.l.b16 %v836
    %v996 = vunpack.c.l.b16 %v837
    %v997 = vunpack.c.l.b16 %v838
    %v998 = vunpack.c.l.b16 %v839
    %v999 = vunpack.c.l.b16 %v840
    %v1000 = vunpack.c.l.b16 %v841
    %v1001 = vpack.c.b16 %v986, %v985
    %v1002 = vpack.c.b16 %v988, %v987
    %v1003 = vpack.c.b16 %v990, %v989
    %v1004 = vpack.c.b16 %v992, %v991
    %v1005 = vpack.c.b16 %v994, %v993
    %v1006 = vpack.c.b16 %v996, %v995
    %v1007 = vpack.c.b16 %v998, %v997
    %v1008 = vpack.c.b16 %v1000, %v999
    %1017 = vmatprep.subr.bf16.mxu0 0
    %1018 = vmatpush1.bf16.msra.mxu0 %v1001
    %1019 = vmatprep.subr.bf16.mxu0 0
    %1020 = vmatpush1.bf16.msra.mxu0 %v1002
    %1021 = vmatprep.subr.bf16.mxu0 0
    %1022 = vmatpush1.bf16.msra.mxu0 %v1003
    %1023 = vmatprep.subr.bf16.mxu0 0
    %1024 = vmatpush1.bf16.msra.mxu0 %v1004
    %1025 = vmatprep.subr.bf16.mxu0 0
    %1026 = vmatpush1.bf16.msra.mxu0 %v1005
    %1027 = vmatprep.subr.bf16.mxu0 0
    %1028 = vmatpush1.bf16.msra.mxu0 %v1006
    %1029 = vmatprep.subr.bf16.mxu0 0
    %1030 = vmatpush1.bf16.msra.mxu0 %v1007
    %1031 = vmatprep.subr.bf16.mxu0 0
    %1032 = vmatpush1.bf16.msra.mxu0 %v1008
    %1033 = vmatprep.subr.bf16.mxu0 0
    %1034 = vmatpush1.bf16.msra.mxu0 0
    %1035 = vmatprep.subr.bf16.mxu0 0
    %1036 = vmatpush1.bf16.msra.mxu0 0
    %1037 = vmatprep.subr.bf16.mxu0 0
    %1038 = vmatpush1.bf16.msra.mxu0 0
    %1039 = vmatprep.subr.bf16.mxu0 0
    %1040 = vmatpush1.bf16.msra.mxu0 0
    %1041 = vmatprep.subr.bf16.mxu0 0
    %1042 = vmatpush1.bf16.msra.mxu0 0
    %1043 = vmatprep.subr.bf16.mxu0 0
    %1044 = vmatpush1.bf16.msra.mxu0 0
    %1045 = vmatprep.subr.bf16.mxu0 0
    %1046 = vmatpush1.bf16.msra.mxu0 0
    %1047 = vmatprep.subr.bf16.mxu0 0
    %1048 = vmatpush1.bf16.msra.mxu0 0
    %1049 = vmatprep.mubr.bf16.mxu0 0
    %1050 = vmatmul.mubr.bf16.gmra.mrb[0].mxu0 %v204
    %v1051 = vpop.f32.mrb[0].mxu0
    %v1052 = vadd.f32 %v963, %v1051
    %v1053 = vpop.f32.mrb[0].mxu0
    %v1054 = vpop.f32.mrb[0].mxu0
    %v1055 = vadd.f32 %v966, %v1054
    %v1056 = vpop.f32.mrb[0].mxu0
    %1057 = vdwg.mxu0
    %v1059 = vlaneseq
    %v1060 = vshrl.u32 %v1059, 7
    %v1061 = vsub.s32 0, %v1060
    %v1062 = vrot.slane %v858, %v1061
    %v1064 = vadd.f32 %v1052, %v1062
    %v1065 = vadd.f32 %v1055, %v1062
    %v1066 = vadd.f32 %v1064, %v1065
    %v1067 = vrot.slane %v1066, 4
    %v1068 = vadd.f32 %v1066, %v1067
    %v1069 = vrot.slane %v1068, 2
    %v1070 = vadd.f32 %v1068, %v1069
    %v1071 = vrot.slane %v1070, 1
    %v1072 = vadd.f32 %v1070, %v1071
    %v1073 = vrcp.pop 16.0
    %v1074 = vmul.f32 %v1072, %v1073
    %v1075 = vsub.f32 %v1064, %v1074
    %v1076 = vsub.f32 %v1065, %v1074
    %v1077 = vmul.f32 %v1075, %v1075
    %v1078 = vmul.f32 %v1076, %v1076
    %v1079 = vadd.f32 %v1077, %v1078
    %v1080 = vrot.slane %v1079, 4
    %v1081 = vadd.f32 %v1079, %v1080
    %v1082 = vrot.slane %v1081, 2
    %v1083 = vadd.f32 %v1081, %v1082
    %v1084 = vrot.slane %v1083, 1
    %v1085 = vadd.f32 %v1083, %v1084
    %v1086 = vmul.f32 %v1085, %v1073
    %v1087 = vadd.f32 %v1086, 1e-05
    %v1088 = vrsqrt.pop %v1087
    %v1089 = vmul.f32 %v1075, %v1088
    %v1090 = vmul.f32 %v1076, %v1088
    %v1092 = vlaneseq
    %v1093 = vshrl.u32 %v1092, 7
    %v1094 = vsub.s32 0, %v1093
    %v1095 = vrot.slane %v859, %v1094
    %v1097 = vmul.f32 %v1089, %v1095
    %v1098 = vmul.f32 %v1090, %v1095
    %v1100 = vlaneseq
    %v1101 = vshrl.u32 %v1100, 7
    %v1102 = vsub.s32 0, %v1101
    %v1103 = vrot.slane %v860, %v1102
    %v1105 = vadd.f32 %v1097, %v1103
    %v1106 = vadd.f32 %v1098, %v1103
    %v1107 = vmax.f32 %v1105, 0.0
    %v1108 = vmax.f32 %v1106, 0.0
    %v1109 = vpack.c.bf16 %v1108, %v1107
    %v1111 = vlaneseq
    %v1112 = vshrl.u32 %v1111, 7
    %v1113 = vsub.s32 0, %v1112
    %v1114 = vrot.slane %v877, %v1113
    %v1132 = vunpack.c.l.b16 %v861
    %v1133 = vunpack.c.l.b16 %v862
    %v1134 = vunpack.c.l.b16 %v863
    %v1135 = vunpack.c.l.b16 %v864
    %v1136 = vunpack.c.l.b16 %v865
    %v1137 = vunpack.c.l.b16 %v866
    %v1138 = vunpack.c.l.b16 %v867
    %v1139 = vunpack.c.l.b16 %v868
    %v1140 = vunpack.c.l.b16 %v869
    %v1141 = vunpack.c.l.b16 %v870
    %v1142 = vunpack.c.l.b16 %v871
    %v1143 = vunpack.c.l.b16 %v872
    %v1144 = vunpack.c.l.b16 %v873
    %v1145 = vunpack.c.l.b16 %v874
    %v1146 = vunpack.c.l.b16 %v875
    %v1147 = vunpack.c.l.b16 %v876
    %v1148 = vpack.c.b16 %v1133, %v1132
    %v1149 = vpack.c.b16 %v1135, %v1134
    %v1150 = vpack.c.b16 %v1137, %v1136
    %v1151 = vpack.c.b16 %v1139, %v1138
    %v1152 = vpack.c.b16 %v1141, %v1140
    %v1153 = vpack.c.b16 %v1143, %v1142
    %v1154 = vpack.c.b16 %v1145, %v1144
    %v1155 = vpack.c.b16 %v1147, %v1146
    %1164 = vmatprep.subr.bf16.mxu0 0
    %1165 = vmatpush1.bf16.msra.mxu0 %v1148
    %1166 = vmatprep.subr.bf16.mxu0 0
    %1167 = vmatpush1.bf16.msra.mxu0 %v1149
    %1168 = vmatprep.subr.bf16.mxu0 0
    %1169 = vmatpush1.bf16.msra.mxu0 %v1150
    %1170 = vmatprep.subr.bf16.mxu0 0
    %1171 = vmatpush1.bf16.msra.mxu0 %v1151
    %1172 = vmatprep.subr.bf16.mxu0 0
    %1173 = vmatpush1.bf16.msra.mxu0 %v1152
    %1174 = vmatprep.subr.bf16.mxu0 0
    %1175 = vmatpush1.bf16.msra.mxu0 %v1153
    %1176 = vmatprep.subr.bf16.mxu0 0
    %1177 = vmatpush1.bf16.msra.mxu0 %v1154
    %1178 = vmatprep.subr.bf16.mxu0 0
    %1179 = vmatpush1.bf16.msra.mxu0 %v1155
    %1180 = vmatprep.subr.bf16.mxu0 0
    %1181 = vmatpush1.bf16.msra.mxu0 0
    %1182 = vmatprep.subr.bf16.mxu0 0
    %1183 = vmatpush1.bf16.msra.mxu0 0
    %1184 = vmatprep.subr.bf16.mxu0 0
    %1185 = vmatpush1.bf16.msra.mxu0 0
    %1186 = vmatprep.subr.bf16.mxu0 0
    %1187 = vmatpush1.bf16.msra.mxu0 0
    %1188 = vmatprep.subr.bf16.mxu0 0
    %1189 = vmatpush1.bf16.msra.mxu0 0
    %1190 = vmatprep.subr.bf16.mxu0 0
    %1191 = vmatpush1.bf16.msra.mxu0 0
    %1192 = vmatprep.subr.bf16.mxu0 0
    %1193 = vmatpush1.bf16.msra.mxu0 0
    %1194 = vmatprep.subr.bf16.mxu0 0
    %1195 = vmatpush1.bf16.msra.mxu0 0
    %1196 = vmatprep.mubr.bf16.mxu0 0
    %1197 = vmatmul.mubr.bf16.gmra.mrb[0].mxu0 %v1109
    %v1198 = vpop.f32.mrb[0].mxu0
    %v1199 = vadd.f32 %v1114, %v1198
    %v1200 = vpop.f32.mrb[0].mxu0
    %v1201 = vpop.f32.mrb[0].mxu0
    %v1202 = vadd.f32 %v1114, %v1201
    %v1203 = vpop.f32.mrb[0].mxu0
    %1204 = vdwg.mxu0
    %v1205 = vadd.f32 %v1199, %v1202
    %v1206 = vrot.slane %v1205, 4
    %v1207 = vadd.f32 %v1205, %v1206
    %v1208 = vrot.slane %v1207, 2
    %v1209 = vadd.f32 %v1207, %v1208
    %v1210 = vrot.slane %v1209, 1
    %v1211 = vadd.f32 %v1209, %v1210
    %v1212 = vmul.f32 %v1211, %v1073
    %v1213 = vsub.f32 %v1199, %v1212
    %v1214 = vsub.f32 %v1202, %v1212
    %v1215 = vmul.f32 %v1213, %v1213
    %v1216 = vmul.f32 %v1214, %v1214
    %v1217 = vadd.f32 %v1215, %v1216
    %v1218 = vrot.slane %v1217, 4
    %v1219 = vadd.f32 %v1217, %v1218
    %v1220 = vrot.slane %v1219, 2
    %v1221 = vadd.f32 %v1219, %v1220
    %v1222 = vrot.slane %v1221, 1
    %v1223 = vadd.f32 %v1221, %v1222
    %v1224 = vmul.f32 %v1223, %v1073
    %v1225 = vadd.f32 %v1224, 1e-05
    %v1226 = vrsqrt.pop %v1225
    %v1227 = vmul.f32 %v1213, %v1226
    %v1228 = vmul.f32 %v1214, %v1226
    %v1230 = vlaneseq
    %v1231 = vshrl.u32 %v1230, 7
    %v1232 = vsub.s32 0, %v1231
    %v1233 = vrot.slane %v878, %v1232
    %v1235 = vmul.f32 %v1227, %v1233
    %v1236 = vmul.f32 %v1228, %v1233
    %v1238 = vlaneseq
    %v1239 = vshrl.u32 %v1238, 7
    %v1240 = vsub.s32 0, %v1239
    %v1241 = vrot.slane %v879, %v1240
    %v1243 = vadd.f32 %v1235, %v1241
    %v1244 = vadd.f32 %v1236, %v1241
    %v1245 = vmax.f32 %v1243, 0.0
    %v1246 = vmax.f32 %v1244, 0.0
    %1247 = vst [vmem:[#allocation16] sm:$0xff] %v1245
    %1248 = vst [vmem:[#allocation16 + $0x8] sm:$0xff] %v1246
    // Predicated region
    $region118: #{tpu_custom_call.1} parent=1 // pred_check
      _
    $region119: #{tpu_custom_call.1} parent=1 // pred_check_branch
      %1250 = sbr.rel (0) target = $region121
    $region120: #{tpu_custom_call.1} parent=1 // pred_region
      %s1252 = ssub.s32 256, 256
      %1253 = vsyncadd [#allocation4], %s1252
      %s1254 = sshll.u32 [#allocation16], 4
      %s1255 = int_to_ptr.vmem [resolvable:$true] %s1254
      %1260 = dma.vmem_to_hbm [thread:$0]  %s1255, 256, %s21, [#allocation4], 128, 128, 8
    $region121: #{tpu_custom_call.1} parent=1 // pred_fallthru
      _
    // Predicated region
    $region122: #{tpu_custom_call.1} parent=1 // pred_check
      _
    $region123: #{tpu_custom_call.1} parent=1 // pred_check_branch
      %1262 = sbr.rel (0) target = $region125
    $region124: #{tpu_custom_call.1} parent=1 // pred_region
      %s1264 = ssub.s32 512, 512
      %1265 = vsyncadd [#allocation18], %s1264
      %s1266 = sshll.u32 [#allocation17], 4
      %s1267 = int_to_ptr.vmem [resolvable:$true] %s1266
      %1272 = dma.vmem_to_hbm [thread:$0]  %s1267, 512, %s22, [#allocation18], 128, 128, 8
    $region125: #{tpu_custom_call.1} parent=1 // pred_fallthru
      _
    // Predicated region
    $region126: #{tpu_custom_call.1} parent=1 // pred_check
      _
    $region127: #{tpu_custom_call.1} parent=1 // pred_check_branch
      %1274 = sbr.rel (0) target = $region129
    $region128: #{tpu_custom_call.1} parent=1 // pred_region
      %1275 = dma.done [#allocation4], 256
    $region129: #{tpu_custom_call.1} parent=1 // pred_fallthru
      _
    // Predicated region
    $region130: #{tpu_custom_call.1} parent=1 // pred_check
      _
    $region131: #{tpu_custom_call.1} parent=1 // pred_check_branch
      %1277 = sbr.rel (0) target = $region133
    $region132: #{tpu_custom_call.1} parent=1 // pred_region
      %1278 = dma.done [#allocation18], 512
    $region133: #{tpu_custom_call.1} parent=1 // pred_fallthru
      _
    %1279 = vsyncpa [#allocation3], 1
    %1280 = vsyncpa [#allocation6], 1
    %1281 = vsyncpa [#allocation9], 1
    %1282 = vsyncpa [#allocation12], 1
    %1283 = vsyncpa [#allocation15], 1
    %1284 = vsyncpa [#allocation4], 1
    %1285 = vsyncpa [#allocation18], 1

</llo_original>
